<compile_context>
chip_gen: v7x
topology: tpu7x:2x2x1
jax: 0.10.0
libtpu: 0.0.40
codegen_flags: <defaults>
</compile_context>

<pallas_src>
import functools
import math

import jax
import jax.numpy as jnp
from jax import lax
from jax.experimental import pallas as pl
from jax.experimental.pallas import tpu as pltpu


def _encoder_stack_kernel(x_ref,
                          wqkv_ref, bqkv_ref, wo_ref, bo_ref, ln_ref,
                          w1_ref, b1_ref, w2_ref, b2_ref,
                          o_ref, act_ref, *, n_head, eps, batch, seq):
    layer = pl.program_id(0)
    n_layers = pl.num_programs(0)

    # Layer 0: pull the token-flattened activations into the VMEM-resident
    # scratch; they stay resident across every layer of the stack.
    @pl.when(layer == 0)
    def _():
        act_ref[...] = x_ref[...]

    x = act_ref[...]                               # (T, D) f32, T = batch*seq
    T, D = x.shape
    dk = D // n_head
    scale = 1.0 / math.sqrt(dk)

    def linear(a, w_ref, b_ref):
        # bf16 MXU matmul with f32 accumulation; bias add in f32.
        return jnp.dot(a.astype(jnp.bfloat16), w_ref[0],
                       preferred_element_type=jnp.float32) + b_ref[0]

    def layernorm(y, g, b):
        mu = jnp.mean(y, axis=-1, keepdims=True)
        var = jnp.mean(jnp.square(y - mu), axis=-1, keepdims=True)
        return (y - mu) * lax.rsqrt(var + eps) * g + b

    # ---- multi-head self attention (q = k = v = x) --------------------------
    # Fused QKV projection: one (D, 3D) matmul instead of three (D, D).
    qkv = linear(x, wqkv_ref, bqkv_ref)            # (T, 3D) f32
    q = qkv[:, 0 * D:1 * D] * scale                # fold 1/sqrt(dk) into q
    k = qkv[:, 1 * D:2 * D]
    v = qkv[:, 2 * D:3 * D]

    # Back to (B, S, D) so attention never mixes batch elements; the reshape
    # only splits the leading (sublane-major) dim, lanes are untouched.
    q3 = q.reshape(batch, seq, D)
    k3 = k.reshape(batch, seq, D).astype(jnp.bfloat16)
    v3 = v.reshape(batch, seq, D)

    # Heads via lane masks + full-width batched matmuls:
    #   (q * mask_h) @ k^T == q_h @ k_h^T, and p_h @ (v * mask_h) scatters the
    # head's context directly into its own lanes of ctx -- no per-head lane
    # slicing, no concatenate.
    lane = lax.broadcasted_iota(jnp.int32, (1, 1, D), 2)
    ctx = jnp.zeros((batch, seq, D), jnp.float32)
    for h in range(n_head):                        # static unroll over heads
        m = (lane >= h * dk) & (lane < (h + 1) * dk)
        qh = jnp.where(m, q3, 0.0).astype(jnp.bfloat16)
        s = jnp.einsum('bqd,bkd->bqk', qh, k3,
                       preferred_element_type=jnp.float32)
        s = s - jnp.max(s, axis=-1, keepdims=True)
        e = jnp.exp(s)
        p = e * pl.reciprocal(jnp.sum(e, axis=-1, keepdims=True), approx=True)
        vh = jnp.where(m, v3, 0.0).astype(jnp.bfloat16)
        ctx = ctx + jnp.einsum('bqk,bkd->bqd', p.astype(jnp.bfloat16), vh,
                               preferred_element_type=jnp.float32)

    attn = linear(ctx.reshape(T, D), wo_ref, bo_ref)       # output_linear

    ln = ln_ref[0]                                 # (4, D): g1, b1, g2, b2
    y = layernorm(x + attn, ln[0:1], ln[1:2])      # residual + norm1

    # ---- position-wise feed-forward (relu); dropout == identity -------------
    hid = jnp.maximum(linear(y, w1_ref, b1_ref), 0.0)
    ffn = linear(hid, w2_ref, b2_ref)
    y2 = layernorm(y + ffn, ln[2:3], ln[3:4])      # residual + norm2

    act_ref[...] = y2                              # resident for the next layer

    @pl.when(layer == n_layers - 1)
    def _():
        o_ref[...] = y2.astype(o_ref.dtype)


def transformer_encoder(x, stacked_params, n_head, eps=1e-5):
    """x: (B, S, D) f32.  stacked_params: per-layer params stacked on axis 0."""
    B, S, D = x.shape
    L = stacked_params[0].shape[0]
    FF = stacked_params[5].shape[-1]               # w1: (L, D, FF)
    T = B * S

    x2 = x.reshape(T, D)                           # token-flattened slab

    kernel = functools.partial(_encoder_stack_kernel, n_head=n_head, eps=eps,
                               batch=B, seq=S)

    in_specs = [pl.BlockSpec((T, D), lambda l: (0, 0))]
    for p in stacked_params:                       # all params are (L, a, b)
        in_specs.append(pl.BlockSpec((1,) + p.shape[1:], lambda l: (l, 0, 0)))

    flops = L * (2 * T * D * 3 * D                 # fused QKV projection
                 + 2 * T * D * D                   # output projection
                 + 4 * T * D * FF                  # FFN (two matmuls)
                 + 4 * n_head * B * S * S * D)     # attention matmuls
    transcendentals = L * (n_head * B * S * (S + 1) + 2 * T)
    bytes_accessed = 2 * x2.size * x2.dtype.itemsize + sum(
        int(p.size) * p.dtype.itemsize for p in stacked_params)

    # NOTE: at production sizes set pltpu.CompilerParams(vmem_limit_bytes=...)
    # (v6e/v5e) or tile the FFN hidden dim (v7x, 64 MiB VMEM).
    out2 = pl.pallas_call(
        kernel,
        out_shape=jax.ShapeDtypeStruct((T, D), jnp.float32),
        grid_spec=pltpu.PrefetchScalarGridSpec(
            num_scalar_prefetch=0,
            grid=(L,),
            in_specs=in_specs,
            out_specs=pl.BlockSpec((T, D), lambda l: (0, 0)),
            scratch_shapes=[pltpu.VMEM((T, D), jnp.float32)]),
        compiler_params=pltpu.CompilerParams(
            dimension_semantics=("arbitrary",)),
        cost_estimate=pl.CostEstimate(flops=int(flops),
                                      transcendentals=int(transcendentals),
                                      bytes_accessed=int(bytes_accessed)),
    )(x2, *stacked_params)

    return out2.reshape(B, S, D)


def _init_layer(key, d_model, dim_ff):
    """Weights stored (in, out) so y = x @ W + b matches nn.Linear."""
    ks = jax.random.split(key, 8)

    def w(k, din, dout):
        return (jax.random.normal(k, (din, dout), jnp.float32)
                / math.sqrt(din)).astype(jnp.bfloat16)

    def b(k, dout):
        return 0.02 * jax.random.normal(k, (1, dout), jnp.float32)

    wqkv = w(ks[0], d_model, 3 * d_model)          # fused Wq|Wk|Wv
    bqkv = b(ks[1], 3 * d_model)
    wo = w(ks[2], d_model, d_model)
    bo = b(ks[3], d_model)
    # LayerNorm params packed as rows [gamma1, beta1, gamma2, beta2].
    ln = jnp.stack([jnp.ones((d_model,), jnp.float32),
                    jnp.zeros((d_model,), jnp.float32),
                    jnp.ones((d_model,), jnp.float32),
                    jnp.zeros((d_model,), jnp.float32)], axis=0)
    w1 = w(ks[4], d_model, dim_ff)
    b1 = b(ks[5], dim_ff)
    w2 = w(ks[6], dim_ff, d_model)
    b2 = b(ks[7], d_model)
    return (wqkv, bqkv, wo, bo, ln, w1, b1, w2, b2)


def init_stacked_params(key, nlayers, d_model, dim_ff):
    layers = [_init_layer(k, d_model, dim_ff)
              for k in jax.random.split(key, nlayers)]
    return tuple(jnp.stack(ps, axis=0) for ps in zip(*layers))


if __name__ == "__main__":
    # (batch, seqLen, d_model) consistent with the module.
    B, S, D = 2, 8, 32
    N_HEAD, DIM_FF, NLAYERS = 4, 64, 2

    root = jax.random.PRNGKey(0)
    x_key, p_key = jax.random.split(root)
    x = jax.random.normal(x_key, (B, S, D), jnp.float32)
    params = init_stacked_params(p_key, NLAYERS, D, DIM_FF)

    out = transformer_encoder(x, params, N_HEAD)
    out = jax.block_until_ready(out)
    assert out.shape == (B, S, D), out.shape
    assert bool(jnp.all(jnp.isfinite(out)))
    print("KERNEL_OK")
</pallas_src>

<mosaic_0001>
module attributes {stable_mosaic.version = 11 : i64} {
  func.func @_encoder_stack_kernel(%arg0: i32, %arg1: memref<16x32xf32, #tpu.memory_space<vmem>>, %arg2: memref<1x32x96xbf16, #tpu.memory_space<vmem>>, %arg3: memref<1x1x96xf32, #tpu.memory_space<vmem>>, %arg4: memref<1x32x32xbf16, #tpu.memory_space<vmem>>, %arg5: memref<1x1x32xf32, #tpu.memory_space<vmem>>, %arg6: memref<1x4x32xf32, #tpu.memory_space<vmem>>, %arg7: memref<1x32x64xbf16, #tpu.memory_space<vmem>>, %arg8: memref<1x1x64xf32, #tpu.memory_space<vmem>>, %arg9: memref<1x64x32xbf16, #tpu.memory_space<vmem>>, %arg10: memref<1x1x32xf32, #tpu.memory_space<vmem>>, %arg11: memref<16x32xf32, #tpu.memory_space<vmem>>, %arg12: memref<16x32xf32, #tpu.memory_space<vmem>>) attributes {dimension_semantics = [#tpu.dimension_semantics<arbitrary>], iteration_bounds = array<i64: 2>, scalar_prefetch = 0 : i64, scratch_operands = 1 : i64, tpu.core_type = #tpu.core_type<tc>, window_params = [{pipeline_mode = #tpu.pipeline_mode<synchronous>, transform_indices = @transform_0, window_bounds = array<i64: 16, 32>}, {transform_indices = @transform_1, window_bounds = array<i64: 1, 32, 96>}, {transform_indices = @transform_2, window_bounds = array<i64: 1, 1, 96>}, {transform_indices = @transform_3, window_bounds = array<i64: 1, 32, 32>}, {transform_indices = @transform_4, window_bounds = array<i64: 1, 1, 32>}, {transform_indices = @transform_5, window_bounds = array<i64: 1, 4, 32>}, {transform_indices = @transform_6, window_bounds = array<i64: 1, 32, 64>}, {transform_indices = @transform_7, window_bounds = array<i64: 1, 1, 64>}, {transform_indices = @transform_8, window_bounds = array<i64: 1, 64, 32>}, {transform_indices = @transform_9, window_bounds = array<i64: 1, 1, 32>}, {pipeline_mode = #tpu.pipeline_mode<synchronous>, transform_indices = @transform_10, window_bounds = array<i64: 16, 32>}]} {
    %c0_i32 = arith.constant 0 : i32
    %0 = arith.cmpi eq, %arg0, %c0_i32 : i32
    %1 = arith.extui %0 : i1 to i32
    %c0_i32_0 = arith.constant 0 : i32
    %2 = arith.cmpi ne, %1, %c0_i32_0 : i32
    scf.if %2 {
      %c0_76 = arith.constant 0 : index
      %c0_77 = arith.constant 0 : index
      %222 = vector.load %arg1[%c0_76, %c0_77] : memref<16x32xf32, #tpu.memory_space<vmem>>, vector<16x32xf32>
      %c0_78 = arith.constant 0 : index
      %c0_79 = arith.constant 0 : index
      %223 = vector.load %arg12[%c0_78, %c0_79] : memref<16x32xf32, #tpu.memory_space<vmem>>, vector<16x32xf32>
      tpu.vector_store %arg12[%c0_78, %c0_79], %222 {strides = array<i32>} : memref<16x32xf32, #tpu.memory_space<vmem>>, vector<16x32xf32>,
    } else {
    }
    %c0 = arith.constant 0 : index
    %c0_1 = arith.constant 0 : index
    %3 = vector.load %arg12[%c0, %c0_1] : memref<16x32xf32, #tpu.memory_space<vmem>>, vector<16x32xf32>
    %4 = arith.truncf %3 : vector<16x32xf32> to vector<16x32xbf16>
    %c0_2 = arith.constant 0 : index
    %c0_3 = arith.constant 0 : index
    %c0_4 = arith.constant 0 : index
    %5 = vector.load %arg2[%c0_2, %c0_3, %c0_4] : memref<1x32x96xbf16, #tpu.memory_space<vmem>>, vector<1x32x96xbf16>
    %6 = vector.shape_cast %5 : vector<1x32x96xbf16> to vector<32x96xbf16>
    %cst = arith.constant dense<0.000000e+00> : vector<16x96xf32>
    %7 = tpu.matmul %4, %6, %cst {dimension_numbers = #tpu.dot_dimension_numbers<[1], [0], [0], [1], [0, 0, 1, 1], [], []>} : vector<16x32xbf16>, vector<32x96xbf16>, vector<16x96xf32> -> vector<16x96xf32>
    %c0_5 = arith.constant 0 : index
    %c0_6 = arith.constant 0 : index
    %c0_7 = arith.constant 0 : index
    %8 = vector.load %arg3[%c0_5, %c0_6, %c0_7] : memref<1x1x96xf32, #tpu.memory_space<vmem>>, vector<1x1x96xf32>
    %9 = vector.shape_cast %8 : vector<1x1x96xf32> to vector<1x96xf32>
    %10 = vector.broadcast %9 : vector<1x96xf32> to vector<16x96xf32>
    %11 = arith.addf %7, %10 : vector<16x96xf32>
    %12 = vector.extract_strided_slice %11 {offsets = [0, 0], sizes = [16, 32], strides = [1, 1]} : vector<16x96xf32> to vector<16x32xf32>
    %cst_8 = arith.constant 0.353553385 : f32
    %13 = vector.broadcast %cst_8 : f32 to vector<16x32xf32>
    %14 = arith.mulf %12, %13 : vector<16x32xf32>
    %15 = vector.extract_strided_slice %11 {offsets = [0, 32], sizes = [16, 32], strides = [1, 1]} : vector<16x96xf32> to vector<16x32xf32>
    %16 = vector.extract_strided_slice %11 {offsets = [0, 64], sizes = [16, 32], strides = [1, 1]} : vector<16x96xf32> to vector<16x32xf32>
    %17 = vector.shape_cast %14 : vector<16x32xf32> to vector<2x8x32xf32>
    %18 = vector.shape_cast %15 : vector<16x32xf32> to vector<2x8x32xf32>
    %19 = arith.truncf %18 : vector<2x8x32xf32> to vector<2x8x32xbf16>
    %20 = vector.shape_cast %16 : vector<16x32xf32> to vector<2x8x32xf32>
    %21 = tpu.iota {dimensions = array<i32: 2>} : vector<1x1x32xi32>
    %cst_9 = arith.constant 0.000000e+00 : f32
    %22 = vector.broadcast %cst_9 : f32 to vector<2x8x32xf32>
    %c0_i32_10 = arith.constant 0 : i32
    %23 = vector.broadcast %c0_i32_10 : i32 to vector<1x1x32xi32>
    %24 = arith.cmpi sge, %21, %23 : vector<1x1x32xi32>
    %c8_i32 = arith.constant 8 : i32
    %25 = vector.broadcast %c8_i32 : i32 to vector<1x1x32xi32>
    %26 = arith.cmpi slt, %21, %25 : vector<1x1x32xi32>
    %27 = arith.andi %24, %26 : vector<1x1x32xi1>
    %cst_11 = arith.constant 0.000000e+00 : f32
    %28 = vector.shape_cast %27 : vector<1x1x32xi1> to vector<1x1x32xi1>
    %29 = vector.broadcast %28 : vector<1x1x32xi1> to vector<2x8x32xi1>
    %30 = vector.broadcast %cst_11 : f32 to vector<2x8x32xf32>
    %31 = arith.select %29, %17, %30 : vector<2x8x32xi1>, vector<2x8x32xf32>
    %32 = arith.truncf %31 : vector<2x8x32xf32> to vector<2x8x32xbf16>
    "tpu.trace_start"() <{level = 10 : i32, message = "bqd,bkd->bqk"}> : () -> ()
    %cst_12 = arith.constant dense<0.000000e+00> : vector<2x8x8xf32>
    %33 = tpu.matmul %32, %19, %cst_12 {dimension_numbers = #tpu.dot_dimension_numbers<[2], [2], [1], [1], [0, 0, 0, 1, 1, 1], [0], [0]>} : vector<2x8x32xbf16>, vector<2x8x32xbf16>, vector<2x8x8xf32> -> vector<2x8x8xf32>
    "tpu.trace_stop"() : () -> ()
    %cst_13 = arith.constant dense<0xFF800000> : vector<2x8xf32>
    %34 = vector.multi_reduction <maximumf>, %33, %cst_13 [2] : vector<2x8x8xf32> to vector<2x8xf32>
    %35 = vector.shape_cast %34 : vector<2x8xf32> to vector<2x8x1xf32>
    %36 = vector.broadcast %35 : vector<2x8x1xf32> to vector<2x8x8xf32>
    %37 = arith.subf %33, %36 : vector<2x8x8xf32>
    %38 = math.exp %37 : vector<2x8x8xf32>
    %cst_14 = arith.constant dense<0.000000e+00> : vector<2x8xf32>
    %39 = vector.multi_reduction <add>, %38, %cst_14 [2] : vector<2x8x8xf32> to vector<2x8xf32>
    %40 = vector.shape_cast %39 : vector<2x8xf32> to vector<2x8x1xf32>
    %41 = tpu.reciprocal %40 {approx = true} : vector<2x8x1xf32> -> vector<2x8x1xf32>
    %42 = vector.broadcast %41 : vector<2x8x1xf32> to vector<2x8x8xf32>
    %43 = arith.mulf %38, %42 : vector<2x8x8xf32>
    %cst_15 = arith.constant 0.000000e+00 : f32
    %44 = vector.shape_cast %27 : vector<1x1x32xi1> to vector<1x1x32xi1>
    %45 = vector.broadcast %44 : vector<1x1x32xi1> to vector<2x8x32xi1>
    %46 = vector.broadcast %cst_15 : f32 to vector<2x8x32xf32>
    %47 = arith.select %45, %20, %46 : vector<2x8x32xi1>, vector<2x8x32xf32>
    %48 = arith.truncf %47 : vector<2x8x32xf32> to vector<2x8x32xbf16>
    %49 = arith.truncf %43 : vector<2x8x8xf32> to vector<2x8x8xbf16>
    "tpu.trace_start"() <{level = 10 : i32, message = "bqk,bkd->bqd"}> : () -> ()
    %cst_16 = arith.constant dense<0.000000e+00> : vector<2x8x32xf32>
    %50 = tpu.matmul %49, %48, %cst_16 {dimension_numbers = #tpu.dot_dimension_numbers<[2], [1], [1], [2], [0, 0, 0, 1, 1, 2], [0], [0]>} : vector<2x8x8xbf16>, vector<2x8x32xbf16>, vector<2x8x32xf32> -> vector<2x8x32xf32>
    "tpu.trace_stop"() : () -> ()
    %51 = arith.addf %22, %50 : vector<2x8x32xf32>
    %c8_i32_17 = arith.constant 8 : i32
    %52 = vector.broadcast %c8_i32_17 : i32 to vector<1x1x32xi32>
    %53 = arith.cmpi sge, %21, %52 : vector<1x1x32xi32>
    %c16_i32 = arith.constant 16 : i32
    %54 = vector.broadcast %c16_i32 : i32 to vector<1x1x32xi32>
    %55 = arith.cmpi slt, %21, %54 : vector<1x1x32xi32>
    %56 = arith.andi %53, %55 : vector<1x1x32xi1>
    %cst_18 = arith.constant 0.000000e+00 : f32
    %57 = vector.shape_cast %56 : vector<1x1x32xi1> to vector<1x1x32xi1>
    %58 = vector.broadcast %57 : vector<1x1x32xi1> to vector<2x8x32xi1>
    %59 = vector.broadcast %cst_18 : f32 to vector<2x8x32xf32>
    %60 = arith.select %58, %17, %59 : vector<2x8x32xi1>, vector<2x8x32xf32>
    %61 = arith.truncf %60 : vector<2x8x32xf32> to vector<2x8x32xbf16>
    "tpu.trace_start"() <{level = 10 : i32, message = "bqd,bkd->bqk"}> : () -> ()
    %cst_19 = arith.constant dense<0.000000e+00> : vector<2x8x8xf32>
    %62 = tpu.matmul %61, %19, %cst_19 {dimension_numbers = #tpu.dot_dimension_numbers<[2], [2], [1], [1], [0, 0, 0, 1, 1, 1], [0], [0]>} : vector<2x8x32xbf16>, vector<2x8x32xbf16>, vector<2x8x8xf32> -> vector<2x8x8xf32>
    "tpu.trace_stop"() : () -> ()
    %cst_20 = arith.constant dense<0xFF800000> : vector<2x8xf32>
    %63 = vector.multi_reduction <maximumf>, %62, %cst_20 [2] : vector<2x8x8xf32> to vector<2x8xf32>
    %64 = vector.shape_cast %63 : vector<2x8xf32> to vector<2x8x1xf32>
    %65 = vector.broadcast %64 : vector<2x8x1xf32> to vector<2x8x8xf32>
    %66 = arith.subf %62, %65 : vector<2x8x8xf32>
    %67 = math.exp %66 : vector<2x8x8xf32>
    %cst_21 = arith.constant dense<0.000000e+00> : vector<2x8xf32>
    %68 = vector.multi_reduction <add>, %67, %cst_21 [2] : vector<2x8x8xf32> to vector<2x8xf32>
    %69 = vector.shape_cast %68 : vector<2x8xf32> to vector<2x8x1xf32>
    %70 = tpu.reciprocal %69 {approx = true} : vector<2x8x1xf32> -> vector<2x8x1xf32>
    %71 = vector.broadcast %70 : vector<2x8x1xf32> to vector<2x8x8xf32>
    %72 = arith.mulf %67, %71 : vector<2x8x8xf32>
    %cst_22 = arith.constant 0.000000e+00 : f32
    %73 = vector.shape_cast %56 : vector<1x1x32xi1> to vector<1x1x32xi1>
    %74 = vector.broadcast %73 : vector<1x1x32xi1> to vector<2x8x32xi1>
    %75 = vector.broadcast %cst_22 : f32 to vector<2x8x32xf32>
    %76 = arith.select %74, %20, %75 : vector<2x8x32xi1>, vector<2x8x32xf32>
    %77 = arith.truncf %76 : vector<2x8x32xf32> to vector<2x8x32xbf16>
    %78 = arith.truncf %72 : vector<2x8x8xf32> to vector<2x8x8xbf16>
    "tpu.trace_start"() <{level = 10 : i32, message = "bqk,bkd->bqd"}> : () -> ()
    %cst_23 = arith.constant dense<0.000000e+00> : vector<2x8x32xf32>
    %79 = tpu.matmul %78, %77, %cst_23 {dimension_numbers = #tpu.dot_dimension_numbers<[2], [1], [1], [2], [0, 0, 0, 1, 1, 2], [0], [0]>} : vector<2x8x8xbf16>, vector<2x8x32xbf16>, vector<2x8x32xf32> -> vector<2x8x32xf32>
    "tpu.trace_stop"() : () -> ()
    %80 = arith.addf %51, %79 : vector<2x8x32xf32>
    %c16_i32_24 = arith.constant 16 : i32
    %81 = vector.broadcast %c16_i32_24 : i32 to vector<1x1x32xi32>
    %82 = arith.cmpi sge, %21, %81 : vector<1x1x32xi32>
    %c24_i32 = arith.constant 24 : i32
    %83 = vector.broadcast %c24_i32 : i32 to vector<1x1x32xi32>
    %84 = arith.cmpi slt, %21, %83 : vector<1x1x32xi32>
    %85 = arith.andi %82, %84 : vector<1x1x32xi1>
    %cst_25 = arith.constant 0.000000e+00 : f32
    %86 = vector.shape_cast %85 : vector<1x1x32xi1> to vector<1x1x32xi1>
    %87 = vector.broadcast %86 : vector<1x1x32xi1> to vector<2x8x32xi1>
    %88 = vector.broadcast %cst_25 : f32 to vector<2x8x32xf32>
    %89 = arith.select %87, %17, %88 : vector<2x8x32xi1>, vector<2x8x32xf32>
    %90 = arith.truncf %89 : vector<2x8x32xf32> to vector<2x8x32xbf16>
    "tpu.trace_start"() <{level = 10 : i32, message = "bqd,bkd->bqk"}> : () -> ()
    %cst_26 = arith.constant dense<0.000000e+00> : vector<2x8x8xf32>
    %91 = tpu.matmul %90, %19, %cst_26 {dimension_numbers = #tpu.dot_dimension_numbers<[2], [2], [1], [1], [0, 0, 0, 1, 1, 1], [0], [0]>} : vector<2x8x32xbf16>, vector<2x8x32xbf16>, vector<2x8x8xf32> -> vector<2x8x8xf32>
    "tpu.trace_stop"() : () -> ()
    %cst_27 = arith.constant dense<0xFF800000> : vector<2x8xf32>
    %92 = vector.multi_reduction <maximumf>, %91, %cst_27 [2] : vector<2x8x8xf32> to vector<2x8xf32>
    %93 = vector.shape_cast %92 : vector<2x8xf32> to vector<2x8x1xf32>
    %94 = vector.broadcast %93 : vector<2x8x1xf32> to vector<2x8x8xf32>
    %95 = arith.subf %91, %94 : vector<2x8x8xf32>
    %96 = math.exp %95 : vector<2x8x8xf32>
    %cst_28 = arith.constant dense<0.000000e+00> : vector<2x8xf32>
    %97 = vector.multi_reduction <add>, %96, %cst_28 [2] : vector<2x8x8xf32> to vector<2x8xf32>
    %98 = vector.shape_cast %97 : vector<2x8xf32> to vector<2x8x1xf32>
    %99 = tpu.reciprocal %98 {approx = true} : vector<2x8x1xf32> -> vector<2x8x1xf32>
    %100 = vector.broadcast %99 : vector<2x8x1xf32> to vector<2x8x8xf32>
    %101 = arith.mulf %96, %100 : vector<2x8x8xf32>
    %cst_29 = arith.constant 0.000000e+00 : f32
    %102 = vector.shape_cast %85 : vector<1x1x32xi1> to vector<1x1x32xi1>
    %103 = vector.broadcast %102 : vector<1x1x32xi1> to vector<2x8x32xi1>
    %104 = vector.broadcast %cst_29 : f32 to vector<2x8x32xf32>
    %105 = arith.select %103, %20, %104 : vector<2x8x32xi1>, vector<2x8x32xf32>
    %106 = arith.truncf %105 : vector<2x8x32xf32> to vector<2x8x32xbf16>
    %107 = arith.truncf %101 : vector<2x8x8xf32> to vector<2x8x8xbf16>
    "tpu.trace_start"() <{level = 10 : i32, message = "bqk,bkd->bqd"}> : () -> ()
    %cst_30 = arith.constant dense<0.000000e+00> : vector<2x8x32xf32>
    %108 = tpu.matmul %107, %106, %cst_30 {dimension_numbers = #tpu.dot_dimension_numbers<[2], [1], [1], [2], [0, 0, 0, 1, 1, 2], [0], [0]>} : vector<2x8x8xbf16>, vector<2x8x32xbf16>, vector<2x8x32xf32> -> vector<2x8x32xf32>
    "tpu.trace_stop"() : () -> ()
    %109 = arith.addf %80, %108 : vector<2x8x32xf32>
    %c24_i32_31 = arith.constant 24 : i32
    %110 = vector.broadcast %c24_i32_31 : i32 to vector<1x1x32xi32>
    %111 = arith.cmpi sge, %21, %110 : vector<1x1x32xi32>
    %c32_i32 = arith.constant 32 : i32
    %112 = vector.broadcast %c32_i32 : i32 to vector<1x1x32xi32>
    %113 = arith.cmpi slt, %21, %112 : vector<1x1x32xi32>
    %114 = arith.andi %111, %113 : vector<1x1x32xi1>
    %cst_32 = arith.constant 0.000000e+00 : f32
    %115 = vector.shape_cast %114 : vector<1x1x32xi1> to vector<1x1x32xi1>
    %116 = vector.broadcast %115 : vector<1x1x32xi1> to vector<2x8x32xi1>
    %117 = vector.broadcast %cst_32 : f32 to vector<2x8x32xf32>
    %118 = arith.select %116, %17, %117 : vector<2x8x32xi1>, vector<2x8x32xf32>
    %119 = arith.truncf %118 : vector<2x8x32xf32> to vector<2x8x32xbf16>
    "tpu.trace_start"() <{level = 10 : i32, message = "bqd,bkd->bqk"}> : () -> ()
    %cst_33 = arith.constant dense<0.000000e+00> : vector<2x8x8xf32>
    %120 = tpu.matmul %119, %19, %cst_33 {dimension_numbers = #tpu.dot_dimension_numbers<[2], [2], [1], [1], [0, 0, 0, 1, 1, 1], [0], [0]>} : vector<2x8x32xbf16>, vector<2x8x32xbf16>, vector<2x8x8xf32> -> vector<2x8x8xf32>
    "tpu.trace_stop"() : () -> ()
    %cst_34 = arith.constant dense<0xFF800000> : vector<2x8xf32>
    %121 = vector.multi_reduction <maximumf>, %120, %cst_34 [2] : vector<2x8x8xf32> to vector<2x8xf32>
    %122 = vector.shape_cast %121 : vector<2x8xf32> to vector<2x8x1xf32>
    %123 = vector.broadcast %122 : vector<2x8x1xf32> to vector<2x8x8xf32>
    %124 = arith.subf %120, %123 : vector<2x8x8xf32>
    %125 = math.exp %124 : vector<2x8x8xf32>
    %cst_35 = arith.constant dense<0.000000e+00> : vector<2x8xf32>
    %126 = vector.multi_reduction <add>, %125, %cst_35 [2] : vector<2x8x8xf32> to vector<2x8xf32>
    %127 = vector.shape_cast %126 : vector<2x8xf32> to vector<2x8x1xf32>
    %128 = tpu.reciprocal %127 {approx = true} : vector<2x8x1xf32> -> vector<2x8x1xf32>
    %129 = vector.broadcast %128 : vector<2x8x1xf32> to vector<2x8x8xf32>
    %130 = arith.mulf %125, %129 : vector<2x8x8xf32>
    %cst_36 = arith.constant 0.000000e+00 : f32
    %131 = vector.shape_cast %114 : vector<1x1x32xi1> to vector<1x1x32xi1>
    %132 = vector.broadcast %131 : vector<1x1x32xi1> to vector<2x8x32xi1>
    %133 = vector.broadcast %cst_36 : f32 to vector<2x8x32xf32>
    %134 = arith.select %132, %20, %133 : vector<2x8x32xi1>, vector<2x8x32xf32>
    %135 = arith.truncf %134 : vector<2x8x32xf32> to vector<2x8x32xbf16>
    %136 = arith.truncf %130 : vector<2x8x8xf32> to vector<2x8x8xbf16>
    "tpu.trace_start"() <{level = 10 : i32, message = "bqk,bkd->bqd"}> : () -> ()
    %cst_37 = arith.constant dense<0.000000e+00> : vector<2x8x32xf32>
    %137 = tpu.matmul %136, %135, %cst_37 {dimension_numbers = #tpu.dot_dimension_numbers<[2], [1], [1], [2], [0, 0, 0, 1, 1, 2], [0], [0]>} : vector<2x8x8xbf16>, vector<2x8x32xbf16>, vector<2x8x32xf32> -> vector<2x8x32xf32>
    "tpu.trace_stop"() : () -> ()
    %138 = arith.addf %109, %137 : vector<2x8x32xf32>
    %139 = vector.shape_cast %138 : vector<2x8x32xf32> to vector<16x32xf32>
    %140 = arith.truncf %139 : vector<16x32xf32> to vector<16x32xbf16>
    %c0_38 = arith.constant 0 : index
    %c0_39 = arith.constant 0 : index
    %c0_40 = arith.constant 0 : index
    %141 = vector.load %arg4[%c0_38, %c0_39, %c0_40] : memref<1x32x32xbf16, #tpu.memory_space<vmem>>, vector<1x32x32xbf16>
    %142 = vector.shape_cast %141 : vector<1x32x32xbf16> to vector<32x32xbf16>
    %cst_41 = arith.constant dense<0.000000e+00> : vector<16x32xf32>
    %143 = tpu.matmul %140, %142, %cst_41 {dimension_numbers = #tpu.dot_dimension_numbers<[1], [0], [0], [1], [0, 0, 1, 1], [], []>} : vector<16x32xbf16>, vector<32x32xbf16>, vector<16x32xf32> -> vector<16x32xf32>
    %c0_42 = arith.constant 0 : index
    %c0_43 = arith.constant 0 : index
    %c0_44 = arith.constant 0 : index
    %144 = vector.load %arg5[%c0_42, %c0_43, %c0_44] : memref<1x1x32xf32, #tpu.memory_space<vmem>>, vector<1x1x32xf32>
    %145 = vector.shape_cast %144 : vector<1x1x32xf32> to vector<1x32xf32>
    %146 = vector.broadcast %145 : vector<1x32xf32> to vector<16x32xf32>
    %147 = arith.addf %143, %146 : vector<16x32xf32>
    %c0_45 = arith.constant 0 : index
    %c0_46 = arith.constant 0 : index
    %c0_47 = arith.constant 0 : index
    %148 = vector.load %arg6[%c0_45, %c0_46, %c0_47] : memref<1x4x32xf32, #tpu.memory_space<vmem>>, vector<1x4x32xf32>
    %149 = vector.shape_cast %148 : vector<1x4x32xf32> to vector<4x32xf32>
    %150 = arith.addf %3, %147 : vector<16x32xf32>
    %151 = vector.extract_strided_slice %149 {offsets = [0, 0], sizes = [1, 32], strides = [1, 1]} : vector<4x32xf32> to vector<1x32xf32>
    %152 = vector.extract_strided_slice %149 {offsets = [1, 0], sizes = [1, 32], strides = [1, 1]} : vector<4x32xf32> to vector<1x32xf32>
    %cst_48 = arith.constant dense<0.000000e+00> : vector<16xf32>
    %153 = vector.multi_reduction <add>, %150, %cst_48 [1] : vector<16x32xf32> to vector<16xf32>
    %154 = vector.shape_cast %153 : vector<16xf32> to vector<16x1xf32>
    %cst_49 = arith.constant 3.200000e+01 : f32
    %155 = vector.broadcast %cst_49 : f32 to vector<16x1xf32>
    %156 = arith.divf %154, %155 : vector<16x1xf32>
    %157 = vector.broadcast %156 : vector<16x1xf32> to vector<16x32xf32>
    %158 = arith.subf %150, %157 : vector<16x32xf32>
    %159 = arith.mulf %158, %158 : vector<16x32xf32>
    %cst_50 = arith.constant dense<0.000000e+00> : vector<16xf32>
    %160 = vector.multi_reduction <add>, %159, %cst_50 [1] : vector<16x32xf32> to vector<16xf32>
    %161 = vector.shape_cast %160 : vector<16xf32> to vector<16x1xf32>
    %cst_51 = arith.constant 3.200000e+01 : f32
    %162 = vector.broadcast %cst_51 : f32 to vector<16x1xf32>
    %163 = arith.divf %161, %162 : vector<16x1xf32>
    %164 = vector.broadcast %156 : vector<16x1xf32> to vector<16x32xf32>
    %165 = arith.subf %150, %164 : vector<16x32xf32>
    %cst_52 = arith.constant 9.99999974E-6 : f32
    %166 = vector.broadcast %cst_52 : f32 to vector<16x1xf32>
    %167 = arith.addf %163, %166 : vector<16x1xf32>
    %168 = math.rsqrt %167 : vector<16x1xf32>
    %169 = vector.broadcast %168 : vector<16x1xf32> to vector<16x32xf32>
    %170 = arith.mulf %165, %169 : vector<16x32xf32>
    %171 = vector.broadcast %151 : vector<1x32xf32> to vector<16x32xf32>
    %172 = arith.mulf %170, %171 : vector<16x32xf32>
    %173 = vector.broadcast %152 : vector<1x32xf32> to vector<16x32xf32>
    %174 = arith.addf %172, %173 : vector<16x32xf32>
    %175 = arith.truncf %174 : vector<16x32xf32> to vector<16x32xbf16>
    %c0_53 = arith.constant 0 : index
    %c0_54 = arith.constant 0 : index
    %c0_55 = arith.constant 0 : index
    %176 = vector.load %arg7[%c0_53, %c0_54, %c0_55] : memref<1x32x64xbf16, #tpu.memory_space<vmem>>, vector<1x32x64xbf16>
    %177 = vector.shape_cast %176 : vector<1x32x64xbf16> to vector<32x64xbf16>
    %cst_56 = arith.constant dense<0.000000e+00> : vector<16x64xf32>
    %178 = tpu.matmul %175, %177, %cst_56 {dimension_numbers = #tpu.dot_dimension_numbers<[1], [0], [0], [1], [0, 0, 1, 1], [], []>} : vector<16x32xbf16>, vector<32x64xbf16>, vector<16x64xf32> -> vector<16x64xf32>
    %c0_57 = arith.constant 0 : index
    %c0_58 = arith.constant 0 : index
    %c0_59 = arith.constant 0 : index
    %179 = vector.load %arg8[%c0_57, %c0_58, %c0_59] : memref<1x1x64xf32, #tpu.memory_space<vmem>>, vector<1x1x64xf32>
    %180 = vector.shape_cast %179 : vector<1x1x64xf32> to vector<1x64xf32>
    %181 = vector.broadcast %180 : vector<1x64xf32> to vector<16x64xf32>
    %182 = arith.addf %178, %181 : vector<16x64xf32>
    %cst_60 = arith.constant 0.000000e+00 : f32
    %183 = vector.broadcast %cst_60 : f32 to vector<16x64xf32>
    %184 = arith.maximumf %182, %183 : vector<16x64xf32>
    %185 = arith.truncf %184 : vector<16x64xf32> to vector<16x64xbf16>
    %c0_61 = arith.constant 0 : index
    %c0_62 = arith.constant 0 : index
    %c0_63 = arith.constant 0 : index
    %186 = vector.load %arg9[%c0_61, %c0_62, %c0_63] : memref<1x64x32xbf16, #tpu.memory_space<vmem>>, vector<1x64x32xbf16>
    %187 = vector.shape_cast %186 : vector<1x64x32xbf16> to vector<64x32xbf16>
    %cst_64 = arith.constant dense<0.000000e+00> : vector<16x32xf32>
    %188 = tpu.matmul %185, %187, %cst_64 {dimension_numbers = #tpu.dot_dimension_numbers<[1], [0], [0], [1], [0, 0, 1, 1], [], []>} : vector<16x64xbf16>, vector<64x32xbf16>, vector<16x32xf32> -> vector<16x32xf32>
    %c0_65 = arith.constant 0 : index
    %c0_66 = arith.constant 0 : index
    %c0_67 = arith.constant 0 : index
    %189 = vector.load %arg10[%c0_65, %c0_66, %c0_67] : memref<1x1x32xf32, #tpu.memory_space<vmem>>, vector<1x1x32xf32>
    %190 = vector.shape_cast %189 : vector<1x1x32xf32> to vector<1x32xf32>
    %191 = vector.broadcast %190 : vector<1x32xf32> to vector<16x32xf32>
    %192 = arith.addf %188, %191 : vector<16x32xf32>
    %193 = arith.addf %174, %192 : vector<16x32xf32>
    %194 = vector.extract_strided_slice %149 {offsets = [2, 0], sizes = [1, 32], strides = [1, 1]} : vector<4x32xf32> to vector<1x32xf32>
    %195 = vector.extract_strided_slice %149 {offsets = [3, 0], sizes = [1, 32], strides = [1, 1]} : vector<4x32xf32> to vector<1x32xf32>
    %cst_68 = arith.constant dense<0.000000e+00> : vector<16xf32>
    %196 = vector.multi_reduction <add>, %193, %cst_68 [1] : vector<16x32xf32> to vector<16xf32>
    %197 = vector.shape_cast %196 : vector<16xf32> to vector<16x1xf32>
    %cst_69 = arith.constant 3.200000e+01 : f32
    %198 = vector.broadcast %cst_69 : f32 to vector<16x1xf32>
    %199 = arith.divf %197, %198 : vector<16x1xf32>
    %200 = vector.broadcast %199 : vector<16x1xf32> to vector<16x32xf32>
    %201 = arith.subf %193, %200 : vector<16x32xf32>
    %202 = arith.mulf %201, %201 : vector<16x32xf32>
    %cst_70 = arith.constant dense<0.000000e+00> : vector<16xf32>
    %203 = vector.multi_reduction <add>, %202, %cst_70 [1] : vector<16x32xf32> to vector<16xf32>
    %204 = vector.shape_cast %203 : vector<16xf32> to vector<16x1xf32>
    %cst_71 = arith.constant 3.200000e+01 : f32
    %205 = vector.broadcast %cst_71 : f32 to vector<16x1xf32>
    %206 = arith.divf %204, %205 : vector<16x1xf32>
    %207 = vector.broadcast %199 : vector<16x1xf32> to vector<16x32xf32>
    %208 = arith.subf %193, %207 : vector<16x32xf32>
    %cst_72 = arith.constant 9.99999974E-6 : f32
    %209 = vector.broadcast %cst_72 : f32 to vector<16x1xf32>
    %210 = arith.addf %206, %209 : vector<16x1xf32>
    %211 = math.rsqrt %210 : vector<16x1xf32>
    %212 = vector.broadcast %211 : vector<16x1xf32> to vector<16x32xf32>
    %213 = arith.mulf %208, %212 : vector<16x32xf32>
    %214 = vector.broadcast %194 : vector<1x32xf32> to vector<16x32xf32>
    %215 = arith.mulf %213, %214 : vector<16x32xf32>
    %216 = vector.broadcast %195 : vector<1x32xf32> to vector<16x32xf32>
    %217 = arith.addf %215, %216 : vector<16x32xf32>
    %c0_73 = arith.constant 0 : index
    %c0_74 = arith.constant 0 : index
    %218 = vector.load %arg12[%c0_73, %c0_74] : memref<16x32xf32, #tpu.memory_space<vmem>>, vector<16x32xf32>
    tpu.vector_store %arg12[%c0_73, %c0_74], %217 {strides = array<i32>} : memref<16x32xf32, #tpu.memory_space<vmem>>, vector<16x32xf32>,
    %c1_i32 = arith.constant 1 : i32
    %219 = arith.cmpi eq, %arg0, %c1_i32 : i32
    %220 = arith.extui %219 : i1 to i32
    %c0_i32_75 = arith.constant 0 : i32
    %221 = arith.cmpi ne, %220, %c0_i32_75 : i32
    scf.if %221 {
      %c0_76 = arith.constant 0 : index
      %c0_77 = arith.constant 0 : index
      %222 = vector.load %arg11[%c0_76, %c0_77] : memref<16x32xf32, #tpu.memory_space<vmem>>, vector<16x32xf32>
      tpu.vector_store %arg11[%c0_76, %c0_77], %217 {strides = array<i32>} : memref<16x32xf32, #tpu.memory_space<vmem>>, vector<16x32xf32>,
    } else {
    }
    return
  }
  func.func @transform_0(%arg0: i32) -> (i32, i32) {
    %c0_i32 = arith.constant 0 : i32
    %c0_i32_0 = arith.constant 0 : i32
    %c0_i32_1 = arith.constant 0 : i32
    return %c0_i32, %c0_i32_0 : i32, i32
  }
  func.func @transform_1(%arg0: i32) -> (i32, i32, i32) {
    %c0_i32 = arith.constant 0 : i32
    %c0_i32_0 = arith.constant 0 : i32
    %c0_i32_1 = arith.constant 0 : i32
    return %arg0, %c0_i32, %c0_i32_0 : i32, i32, i32
  }
  func.func @transform_2(%arg0: i32) -> (i32, i32, i32) {
    %c0_i32 = arith.constant 0 : i32
    %c0_i32_0 = arith.constant 0 : i32
    %c0_i32_1 = arith.constant 0 : i32
    return %arg0, %c0_i32, %c0_i32_0 : i32, i32, i32
  }
  func.func @transform_3(%arg0: i32) -> (i32, i32, i32) {
    %c0_i32 = arith.constant 0 : i32
    %c0_i32_0 = arith.constant 0 : i32
    %c0_i32_1 = arith.constant 0 : i32
    return %arg0, %c0_i32, %c0_i32_0 : i32, i32, i32
  }
  func.func @transform_4(%arg0: i32) -> (i32, i32, i32) {
    %c0_i32 = arith.constant 0 : i32
    %c0_i32_0 = arith.constant 0 : i32
    %c0_i32_1 = arith.constant 0 : i32
    return %arg0, %c0_i32, %c0_i32_0 : i32, i32, i32
  }
  func.func @transform_5(%arg0: i32) -> (i32, i32, i32) {
    %c0_i32 = arith.constant 0 : i32
    %c0_i32_0 = arith.constant 0 : i32
    %c0_i32_1 = arith.constant 0 : i32
    return %arg0, %c0_i32, %c0_i32_0 : i32, i32, i32
  }
  func.func @transform_6(%arg0: i32) -> (i32, i32, i32) {
    %c0_i32 = arith.constant 0 : i32
    %c0_i32_0 = arith.constant 0 : i32
    %c0_i32_1 = arith.constant 0 : i32
    return %arg0, %c0_i32, %c0_i32_0 : i32, i32, i32
  }
  func.func @transform_7(%arg0: i32) -> (i32, i32, i32) {
    %c0_i32 = arith.constant 0 : i32
    %c0_i32_0 = arith.constant 0 : i32
    %c0_i32_1 = arith.constant 0 : i32
    return %arg0, %c0_i32, %c0_i32_0 : i32, i32, i32
  }
  func.func @transform_8(%arg0: i32) -> (i32, i32, i32) {
    %c0_i32 = arith.constant 0 : i32
    %c0_i32_0 = arith.constant 0 : i32
    %c0_i32_1 = arith.constant 0 : i32
    return %arg0, %c0_i32, %c0_i32_0 : i32, i32, i32
  }
  func.func @transform_9(%arg0: i32) -> (i32, i32, i32) {
    %c0_i32 = arith.constant 0 : i32
    %c0_i32_0 = arith.constant 0 : i32
    %c0_i32_1 = arith.constant 0 : i32
    return %arg0, %c0_i32, %c0_i32_0 : i32, i32, i32
  }
  func.func @transform_10(%arg0: i32) -> (i32, i32) {
    %c0_i32 = arith.constant 0 : i32
    %c0_i32_0 = arith.constant 0 : i32
    %c0_i32_1 = arith.constant 0 : i32
    return %c0_i32, %c0_i32_0 : i32, i32
  }
}

</mosaic_0001>

<llo_original>
// kernel: tpu_custom_call.1
$region0: #{tpu_custom_call.1}
  #allocation0 [shape = 'u32[]', space=smem, size = 0x4, offset = 0x4, fixed_abs, tag = 'smem constant byte address 0x4 - core index']
  #allocation1 [shape = 'u32[144,128]{1,0:T(1,128)}', space=vmem, size = 0x12000, scoped, tag = 'internal scratch']
  #allocation2 [shape = 'f32[16,32]{1,0:T(8,128)}', space=vmem, size = 0x2000, scoped, tag = 'scratch operand']
  %s0 = inlined_call_operand.hbm [shape: f32[16,32], index: 0, kind: input, shape index: {}]
  %s1 = inlined_call_operand.vmem [shape: bf16[2,32,96], index: 1, kind: input, shape index: {}]
  %s2 = inlined_call_operand.vmem [shape: f32[2,1,96], index: 2, kind: input, shape index: {}]
  %s3 = inlined_call_operand.vmem [shape: bf16[2,32,32], index: 3, kind: input, shape index: {}]
  %s4 = inlined_call_operand.vmem [shape: f32[2,1,32], index: 4, kind: input, shape index: {}]
  %s5 = inlined_call_operand.vmem [shape: f32[2,4,32], index: 5, kind: input, shape index: {}]
  %s6 = inlined_call_operand.vmem [shape: bf16[2,32,64], index: 6, kind: input, shape index: {}]
  %s7 = inlined_call_operand.vmem [shape: f32[2,1,64], index: 7, kind: input, shape index: {}]
  %s8 = inlined_call_operand.vmem [shape: bf16[2,64,32], index: 8, kind: input, shape index: {}]
  %s9 = inlined_call_operand.vmem [shape: f32[2,1,32], index: 9, kind: input, shape index: {}]
  %s10 = inlined_call_operand.hbm [shape: f32[16,32], index: 10, kind: output, shape index: {}]
  %s11 = sld [smem:[#allocation0]]
  $region85: #{tpu_custom_call.1} parent=0
    _
  %s13 = ssub.s32 1, %s11
  %s14 = scalar_select 0, %s13, %s11
  $region1: #{tpu_custom_call.1} parent=0
    #allocation3 [shape = 'u8[8192]{0}', space=vmem, size = 0x2000, scoped, tag = 'input window, operand 0, single buffered']
    #allocation4 [shape = 's32[2]{0}', space=sflag, size = 0x8, scoped, tag = 'scoped memory for tpu_custom_call.1']
    #allocation5 [shape = 's32[2]{0}', space=sflag, size = 0x8, scoped, tag = 'scoped memory for tpu_custom_call.1']
    #allocation6 [shape = 'u8[8192]{0}', space=vmem, size = 0x2000, scoped, tag = 'output window, operand 0, single buffered']
    %15 = vsyncpa [#allocation4], 0
    %16 = vsyncpa [#allocation5], 0
    loop: start=0, step=1, limit=4
    $region2: #{tpu_custom_call.1} parent=1 // loop_pre_header
      _
    $region3: #{tpu_custom_call.1} parent=1 // loop_header
      %s18 = sphi 0, %s22
      %p19 = scmp.ge.s32.totalorder %s18, 4
      %s26 = sphi 0, %s26
      %s28 = sphi 0, %s26
      %s29 = sphi 0, %s28
      %s43 = sphi 0, %s29
      %s49 = sphi 0, %s51
      %s52 = sphi 0, %s49
      %s53 = sphi 0, %s52
      %s69 = sphi 0, %s53
      %s75 = sphi 0, %s77
      %s78 = sphi 0, %s75
      %s79 = sphi 0, %s78
      %s95 = sphi 0, %s79
      %s101 = sphi 0, %s103
      %s104 = sphi 0, %s101
      %s105 = sphi 0, %s104
      %s121 = sphi 0, %s105
      %s127 = sphi 0, %s129
      %s130 = sphi 0, %s127
      %s131 = sphi 0, %s130
      %s147 = sphi 0, %s131
      %s153 = sphi 0, %s155
      %s156 = sphi 0, %s153
      %s157 = sphi 0, %s156
      %s173 = sphi 0, %s157
      %s179 = sphi 0, %s181
      %s182 = sphi 0, %s179
      %s183 = sphi 0, %s182
      %s199 = sphi 0, %s183
      %s205 = sphi 0, %s207
      %s208 = sphi 0, %s205
      %s209 = sphi 0, %s208
      %s225 = sphi 0, %s209
      %s231 = sphi 0, %s233
      %s234 = sphi 0, %s231
      %s235 = sphi 0, %s234
      %s251 = sphi 0, %s235
      %s257 = sphi 0, %s259
      %s260 = sphi 0, %s257
      %s261 = sphi 0, %s260
      %s277 = sphi 0, %s261
      %s281 = sphi 0, %s281
      %s283 = sphi 0, %s281
      %s284 = sphi 0, %s283
      %s298 = sphi 0, %s284
    $region4: #{tpu_custom_call.1} parent=1 // loop_header_branch
      %21 = sbr.rel (%p19) target = $region8
    $region5: #{tpu_custom_call.1} parent=1 // loop_body
      %s23 = ssub.s32 %s18, 1
      %s24 = ssub.s32 %s18, 2
      %s25 = sadd.s32 %s18, 1
      %s27 = sadd.s32 %s26, 1
      %p30 = scmp.eq.s32.totalorder %s18, 1
      %p31 = scmp.ne.s32.totalorder %s26, %s28
      %p32 = scmp.eq.s32.totalorder %s18, 0
      %p33 = por %p31, %p32
      %p34 = scmp.ne.s32.totalorder %s26, %s28
      %p35 = scmp.eq.s32.totalorder %s23, 1
      %p36 = por %p34, %p35
      %p37 = scmp.ne.s32.totalorder %s28, %s29
      %p38 = scmp.eq.s32.totalorder %s23, 0
      %p39 = por %p37, %p38
      %p40 = scmp.ne.s32.totalorder %s28, %s29
      %p41 = scmp.eq.s32.totalorder %s24, 1
      %p42 = por %p40, %p41
      %p44 = scmp.ne.s32.totalorder %s29, %s43
      %p45 = scmp.eq.s32.totalorder %s24, 0
      %p46 = por %p44, %p45
      %s47 = ssub.s32 %s18, %s25
      %p48 = scmp.eq.s32.totalorder %s47, 0
      %s50 = sadd.s32 %s49, 1
      %s51 = scalar_select %p48, %s49, %s50
      %p54 = pneg %p48
      %p55 = scmp.eq.s32.totalorder %s18, 1
      %p56 = por %p54, %p55
      %p57 = scmp.ne.s32.totalorder %s49, %s52
      %p58 = scmp.eq.s32.totalorder %s18, 0
      %p59 = por %p57, %p58
      %p60 = scmp.ne.s32.totalorder %s49, %s52
      %p61 = scmp.eq.s32.totalorder %s23, 1
      %p62 = por %p60, %p61
      %p63 = scmp.ne.s32.totalorder %s52, %s53
      %p64 = scmp.eq.s32.totalorder %s23, 0
      %p65 = por %p63, %p64
      %p66 = scmp.ne.s32.totalorder %s52, %s53
      %p67 = scmp.eq.s32.totalorder %s24, 1
      %p68 = por %p66, %p67
      %p70 = scmp.ne.s32.totalorder %s53, %s69
      %p71 = scmp.eq.s32.totalorder %s24, 0
      %p72 = por %p70, %p71
      %s73 = ssub.s32 %s18, %s25
      %p74 = scmp.eq.s32.totalorder %s73, 0
      %s76 = sadd.s32 %s75, 1
      %s77 = scalar_select %p74, %s75, %s76
      %p80 = pneg %p74
      %p81 = scmp.eq.s32.totalorder %s18, 1
      %p82 = por %p80, %p81
      %p83 = scmp.ne.s32.totalorder %s75, %s78
      %p84 = scmp.eq.s32.totalorder %s18, 0
      %p85 = por %p83, %p84
      %p86 = scmp.ne.s32.totalorder %s75, %s78
      %p87 = scmp.eq.s32.totalorder %s23, 1
      %p88 = por %p86, %p87
      %p89 = scmp.ne.s32.totalorder %s78, %s79
      %p90 = scmp.eq.s32.totalorder %s23, 0
      %p91 = por %p89, %p90
      %p92 = scmp.ne.s32.totalorder %s78, %s79
      %p93 = scmp.eq.s32.totalorder %s24, 1
      %p94 = por %p92, %p93
      %p96 = scmp.ne.s32.totalorder %s79, %s95
      %p97 = scmp.eq.s32.totalorder %s24, 0
      %p98 = por %p96, %p97
      %s99 = ssub.s32 %s18, %s25
      %p100 = scmp.eq.s32.totalorder %s99, 0
      %s102 = sadd.s32 %s101, 1
      %s103 = scalar_select %p100, %s101, %s102
      %p106 = pneg %p100
      %p107 = scmp.eq.s32.totalorder %s18, 1
      %p108 = por %p106, %p107
      %p109 = scmp.ne.s32.totalorder %s101, %s104
      %p110 = scmp.eq.s32.totalorder %s18, 0
      %p111 = por %p109, %p110
      %p112 = scmp.ne.s32.totalorder %s101, %s104
      %p113 = scmp.eq.s32.totalorder %s23, 1
      %p114 = por %p112, %p113
      %p115 = scmp.ne.s32.totalorder %s104, %s105
      %p116 = scmp.eq.s32.totalorder %s23, 0
      %p117 = por %p115, %p116
      %p118 = scmp.ne.s32.totalorder %s104, %s105
      %p119 = scmp.eq.s32.totalorder %s24, 1
      %p120 = por %p118, %p119
      %p122 = scmp.ne.s32.totalorder %s105, %s121
      %p123 = scmp.eq.s32.totalorder %s24, 0
      %p124 = por %p122, %p123
      %s125 = ssub.s32 %s18, %s25
      %p126 = scmp.eq.s32.totalorder %s125, 0
      %s128 = sadd.s32 %s127, 1
      %s129 = scalar_select %p126, %s127, %s128
      %p132 = pneg %p126
      %p133 = scmp.eq.s32.totalorder %s18, 1
      %p134 = por %p132, %p133
      %p135 = scmp.ne.s32.totalorder %s127, %s130
      %p136 = scmp.eq.s32.totalorder %s18, 0
      %p137 = por %p135, %p136
      %p138 = scmp.ne.s32.totalorder %s127, %s130
      %p139 = scmp.eq.s32.totalorder %s23, 1
      %p140 = por %p138, %p139
      %p141 = scmp.ne.s32.totalorder %s130, %s131
      %p142 = scmp.eq.s32.totalorder %s23, 0
      %p143 = por %p141, %p142
      %p144 = scmp.ne.s32.totalorder %s130, %s131
      %p145 = scmp.eq.s32.totalorder %s24, 1
      %p146 = por %p144, %p145
      %p148 = scmp.ne.s32.totalorder %s131, %s147
      %p149 = scmp.eq.s32.totalorder %s24, 0
      %p150 = por %p148, %p149
      %s151 = ssub.s32 %s18, %s25
      %p152 = scmp.eq.s32.totalorder %s151, 0
      %s154 = sadd.s32 %s153, 1
      %s155 = scalar_select %p152, %s153, %s154
      %p158 = pneg %p152
      %p159 = scmp.eq.s32.totalorder %s18, 1
      %p160 = por %p158, %p159
      %p161 = scmp.ne.s32.totalorder %s153, %s156
      %p162 = scmp.eq.s32.totalorder %s18, 0
      %p163 = por %p161, %p162
      %p164 = scmp.ne.s32.totalorder %s153, %s156
      %p165 = scmp.eq.s32.totalorder %s23, 1
      %p166 = por %p164, %p165
      %p167 = scmp.ne.s32.totalorder %s156, %s157
      %p168 = scmp.eq.s32.totalorder %s23, 0
      %p169 = por %p167, %p168
      %p170 = scmp.ne.s32.totalorder %s156, %s157
      %p171 = scmp.eq.s32.totalorder %s24, 1
      %p172 = por %p170, %p171
      %p174 = scmp.ne.s32.totalorder %s157, %s173
      %p175 = scmp.eq.s32.totalorder %s24, 0
      %p176 = por %p174, %p175
      %s177 = ssub.s32 %s18, %s25
      %p178 = scmp.eq.s32.totalorder %s177, 0
      %s180 = sadd.s32 %s179, 1
      %s181 = scalar_select %p178, %s179, %s180
      %p184 = pneg %p178
      %p185 = scmp.eq.s32.totalorder %s18, 1
      %p186 = por %p184, %p185
      %p187 = scmp.ne.s32.totalorder %s179, %s182
      %p188 = scmp.eq.s32.totalorder %s18, 0
      %p189 = por %p187, %p188
      %p190 = scmp.ne.s32.totalorder %s179, %s182
      %p191 = scmp.eq.s32.totalorder %s23, 1
      %p192 = por %p190, %p191
      %p193 = scmp.ne.s32.totalorder %s182, %s183
      %p194 = scmp.eq.s32.totalorder %s23, 0
      %p195 = por %p193, %p194
      %p196 = scmp.ne.s32.totalorder %s182, %s183
      %p197 = scmp.eq.s32.totalorder %s24, 1
      %p198 = por %p196, %p197
      %p200 = scmp.ne.s32.totalorder %s183, %s199
      %p201 = scmp.eq.s32.totalorder %s24, 0
      %p202 = por %p200, %p201
      %s203 = ssub.s32 %s18, %s25
      %p204 = scmp.eq.s32.totalorder %s203, 0
      %s206 = sadd.s32 %s205, 1
      %s207 = scalar_select %p204, %s205, %s206
      %p210 = pneg %p204
      %p211 = scmp.eq.s32.totalorder %s18, 1
      %p212 = por %p210, %p211
      %p213 = scmp.ne.s32.totalorder %s205, %s208
      %p214 = scmp.eq.s32.totalorder %s18, 0
      %p215 = por %p213, %p214
      %p216 = scmp.ne.s32.totalorder %s205, %s208
      %p217 = scmp.eq.s32.totalorder %s23, 1
      %p218 = por %p216, %p217
      %p219 = scmp.ne.s32.totalorder %s208, %s209
      %p220 = scmp.eq.s32.totalorder %s23, 0
      %p221 = por %p219, %p220
      %p222 = scmp.ne.s32.totalorder %s208, %s209
      %p223 = scmp.eq.s32.totalorder %s24, 1
      %p224 = por %p222, %p223
      %p226 = scmp.ne.s32.totalorder %s209, %s225
      %p227 = scmp.eq.s32.totalorder %s24, 0
      %p228 = por %p226, %p227
      %s229 = ssub.s32 %s18, %s25
      %p230 = scmp.eq.s32.totalorder %s229, 0
      %s232 = sadd.s32 %s231, 1
      %s233 = scalar_select %p230, %s231, %s232
      %p236 = pneg %p230
      %p237 = scmp.eq.s32.totalorder %s18, 1
      %p238 = por %p236, %p237
      %p239 = scmp.ne.s32.totalorder %s231, %s234
      %p240 = scmp.eq.s32.totalorder %s18, 0
      %p241 = por %p239, %p240
      %p242 = scmp.ne.s32.totalorder %s231, %s234
      %p243 = scmp.eq.s32.totalorder %s23, 1
      %p244 = por %p242, %p243
      %p245 = scmp.ne.s32.totalorder %s234, %s235
      %p246 = scmp.eq.s32.totalorder %s23, 0
      %p247 = por %p245, %p246
      %p248 = scmp.ne.s32.totalorder %s234, %s235
      %p249 = scmp.eq.s32.totalorder %s24, 1
      %p250 = por %p248, %p249
      %p252 = scmp.ne.s32.totalorder %s235, %s251
      %p253 = scmp.eq.s32.totalorder %s24, 0
      %p254 = por %p252, %p253
      %s255 = ssub.s32 %s18, %s25
      %p256 = scmp.eq.s32.totalorder %s255, 0
      %s258 = sadd.s32 %s257, 1
      %s259 = scalar_select %p256, %s257, %s258
      %p262 = pneg %p256
      %p263 = scmp.eq.s32.totalorder %s18, 1
      %p264 = por %p262, %p263
      %p265 = scmp.ne.s32.totalorder %s257, %s260
      %p266 = scmp.eq.s32.totalorder %s18, 0
      %p267 = por %p265, %p266
      %p268 = scmp.ne.s32.totalorder %s257, %s260
      %p269 = scmp.eq.s32.totalorder %s23, 1
      %p270 = por %p268, %p269
      %p271 = scmp.ne.s32.totalorder %s260, %s261
      %p272 = scmp.eq.s32.totalorder %s23, 0
      %p273 = por %p271, %p272
      %p274 = scmp.ne.s32.totalorder %s260, %s261
      %p275 = scmp.eq.s32.totalorder %s24, 1
      %p276 = por %p274, %p275
      %p278 = scmp.ne.s32.totalorder %s261, %s277
      %p279 = scmp.eq.s32.totalorder %s24, 0
      %p280 = por %p278, %p279
      %s282 = sadd.s32 %s281, 1
      %p285 = scmp.eq.s32.totalorder %s18, 1
      %p286 = scmp.ne.s32.totalorder %s281, %s283
      %p287 = scmp.eq.s32.totalorder %s18, 0
      %p288 = por %p286, %p287
      %p289 = scmp.ne.s32.totalorder %s281, %s283
      %p290 = scmp.eq.s32.totalorder %s23, 1
      %p291 = por %p289, %p290
      %p292 = scmp.ne.s32.totalorder %s283, %s284
      %p293 = scmp.eq.s32.totalorder %s23, 0
      %p294 = por %p292, %p293
      %p295 = scmp.ne.s32.totalorder %s283, %s284
      %p296 = scmp.eq.s32.totalorder %s24, 1
      %p297 = por %p295, %p296
      %p299 = scmp.ne.s32.totalorder %s284, %s298
      %p300 = scmp.eq.s32.totalorder %s24, 0
      %p301 = por %p299, %p300
      %p302 = scmp.le.s32.totalorder 1, %s18
      %p303 = scmp.lt.s32.totalorder %s18, 3
      %p304 = pnand %p302, %p303
      %p305 = pneg %p304
      // Predicated region
      $region9: #{tpu_custom_call.1} parent=5 // pred_check
        _
      $region10: #{tpu_custom_call.1} parent=5 // pred_check_branch
        %307 = sbr.rel (%p304) target = $region12
      $region11: #{tpu_custom_call.1} parent=5 // pred_region
        %s308 = ssub.s32 %s18, 1
        // Predicated region
        $region13: #{tpu_custom_call.1} parent=11 // pred_check
          %p309 = pneg %p39
        $region14: #{tpu_custom_call.1} parent=11 // pred_check_branch
          %311 = sbr.rel (%p309) target = $region16
        $region15: #{tpu_custom_call.1} parent=11 // pred_region
          %s313 = ssub.s32 256, 256
          %314 = vsyncadd [#allocation4], %s313
          %s315 = sshll.u32 [#allocation3], 4
          %s316 = int_to_ptr.vmem [resolvable:$true] %s315
          %321 = dma.hbm_to_vmem [thread:$0]  %s0, 256, %s316, [#allocation4], 128, 128, 8
        $region16: #{tpu_custom_call.1} parent=11 // pred_fallthru
          _
      $region12: #{tpu_custom_call.1} parent=5 // pred_fallthru
        _
      %p322 = scmp.lt.s32.totalorder %s18, 2
      // Predicated region
      $region17: #{tpu_custom_call.1} parent=5 // pred_check
        %p323 = pneg %p322
      $region18: #{tpu_custom_call.1} parent=5 // pred_check_branch
        %325 = sbr.rel (%p323) target = $region20
      $region19: #{tpu_custom_call.1} parent=5 // pred_region
        // Predicated region
        $region21: #{tpu_custom_call.1} parent=19 // pred_check
          %p326 = pneg %p59
        $region22: #{tpu_custom_call.1} parent=19 // pred_check_branch
          %328 = sbr.rel (%p326) target = $region24
        $region23: #{tpu_custom_call.1} parent=19 // pred_region
          %p329 = scmp.lt.s32.totalorder %s18, 1
          %s330 = scalar_select %p329, %s18, 1
          %s331 = smul.addr %s330, 4
          %s332 = smul.addr %s331, 4
          %s333 = scalar_lea.vmem %s1, %s332
        $region24: #{tpu_custom_call.1} parent=19 // pred_fallthru
          _
        // Predicated region
        $region25: #{tpu_custom_call.1} parent=19 // pred_check
          %p334 = pneg %p85
        $region26: #{tpu_custom_call.1} parent=19 // pred_check_branch
          %336 = sbr.rel (%p334) target = $region28
        $region27: #{tpu_custom_call.1} parent=19 // pred_region
          %p337 = scmp.lt.s32.totalorder %s18, 1
          %s338 = scalar_select %p337, %s18, 1
          %s339 = scalar_lea.vmem %s2, %s338
        $region28: #{tpu_custom_call.1} parent=19 // pred_fallthru
          _
        // Predicated region
        $region29: #{tpu_custom_call.1} parent=19 // pred_check
          %p340 = pneg %p111
        $region30: #{tpu_custom_call.1} parent=19 // pred_check_branch
          %342 = sbr.rel (%p340) target = $region32
        $region31: #{tpu_custom_call.1} parent=19 // pred_region
          %p343 = scmp.lt.s32.totalorder %s18, 1
          %s344 = scalar_select %p343, %s18, 1
          %s345 = smul.addr %s344, 4
          %s346 = smul.addr %s345, 4
          %s347 = scalar_lea.vmem %s3, %s346
        $region32: #{tpu_custom_call.1} parent=19 // pred_fallthru
          _
        // Predicated region
        $region33: #{tpu_custom_call.1} parent=19 // pred_check
          %p348 = pneg %p137
        $region34: #{tpu_custom_call.1} parent=19 // pred_check_branch
          %350 = sbr.rel (%p348) target = $region36
        $region35: #{tpu_custom_call.1} parent=19 // pred_region
          %p351 = scmp.lt.s32.totalorder %s18, 1
          %s352 = scalar_select %p351, %s18, 1
          %s353 = scalar_lea.vmem %s4, %s352
        $region36: #{tpu_custom_call.1} parent=19 // pred_fallthru
          _
        // Predicated region
        $region37: #{tpu_custom_call.1} parent=19 // pred_check
          %p354 = pneg %p163
        $region38: #{tpu_custom_call.1} parent=19 // pred_check_branch
          %356 = sbr.rel (%p354) target = $region40
        $region39: #{tpu_custom_call.1} parent=19 // pred_region
          %p357 = scmp.lt.s32.totalorder %s18, 1
          %s358 = scalar_select %p357, %s18, 1
          %s359 = smul.addr %s358, 4
          %s360 = scalar_lea.vmem %s5, %s359
        $region40: #{tpu_custom_call.1} parent=19 // pred_fallthru
          _
        // Predicated region
        $region41: #{tpu_custom_call.1} parent=19 // pred_check
          %p361 = pneg %p189
        $region42: #{tpu_custom_call.1} parent=19 // pred_check_branch
          %363 = sbr.rel (%p361) target = $region44
        $region43: #{tpu_custom_call.1} parent=19 // pred_region
          %p364 = scmp.lt.s32.totalorder %s18, 1
          %s365 = scalar_select %p364, %s18, 1
          %s366 = smul.addr %s365, 4
          %s367 = smul.addr %s366, 4
          %s368 = scalar_lea.vmem %s6, %s367
        $region44: #{tpu_custom_call.1} parent=19 // pred_fallthru
          _
        // Predicated region
        $region45: #{tpu_custom_call.1} parent=19 // pred_check
          %p369 = pneg %p215
        $region46: #{tpu_custom_call.1} parent=19 // pred_check_branch
          %371 = sbr.rel (%p369) target = $region48
        $region47: #{tpu_custom_call.1} parent=19 // pred_region
          %p372 = scmp.lt.s32.totalorder %s18, 1
          %s373 = scalar_select %p372, %s18, 1
          %s374 = scalar_lea.vmem %s7, %s373
        $region48: #{tpu_custom_call.1} parent=19 // pred_fallthru
          _
        // Predicated region
        $region49: #{tpu_custom_call.1} parent=19 // pred_check
          %p375 = pneg %p241
        $region50: #{tpu_custom_call.1} parent=19 // pred_check_branch
          %377 = sbr.rel (%p375) target = $region52
        $region51: #{tpu_custom_call.1} parent=19 // pred_region
          %p378 = scmp.lt.s32.totalorder %s18, 1
          %s379 = scalar_select %p378, %s18, 1
          %s380 = smul.addr %s379, 8
          %s381 = smul.addr %s380, 4
          %s382 = scalar_lea.vmem %s8, %s381
        $region52: #{tpu_custom_call.1} parent=19 // pred_fallthru
          _
        // Predicated region
        $region53: #{tpu_custom_call.1} parent=19 // pred_check
          %p383 = pneg %p267
        $region54: #{tpu_custom_call.1} parent=19 // pred_check_branch
          %385 = sbr.rel (%p383) target = $region56
        $region55: #{tpu_custom_call.1} parent=19 // pred_region
          %p386 = scmp.lt.s32.totalorder %s18, 1
          %s387 = scalar_select %p386, %s18, 1
          %s388 = scalar_lea.vmem %s9, %s387
        $region56: #{tpu_custom_call.1} parent=19 // pred_fallthru
          _
      $region20: #{tpu_custom_call.1} parent=5 // pred_fallthru
        _
      %p389 = scmp.le.s32.totalorder 1, %s18
      %p390 = scmp.lt.s32.totalorder %s18, 3
      %p391 = pnand %p389, %p390
      %p392 = pneg %p391
      // Predicated region
      $region57: #{tpu_custom_call.1} parent=5 // pred_check
        _
      $region58: #{tpu_custom_call.1} parent=5 // pred_check_branch
        %394 = sbr.rel (%p391) target = $region60
      $region59: #{tpu_custom_call.1} parent=5 // pred_region
        %s395 = ssub.s32 %s18, 1
        // Predicated region
        $region61: #{tpu_custom_call.1} parent=59 // pred_check
          %p396 = pneg %p39
        $region62: #{tpu_custom_call.1} parent=59 // pred_check_branch
          %398 = sbr.rel (%p396) target = $region64
        $region63: #{tpu_custom_call.1} parent=59 // pred_region
          %399 = dma.done [#allocation4], 256
        $region64: #{tpu_custom_call.1} parent=59 // pred_fallthru
          _
        %p400 = pneg %p39
        %p401 = pneg %p36
        %p402 = scmp.lt.s32.totalorder %s23, 1
        %s403 = scalar_select %p402, %s23, 1
        %s404 = smul.addr %s403, 4
        %s405 = smul.addr %s404, 4
        %s406 = scalar_lea.vmem %s1, %s405
        %p407 = pneg %p65
        %p408 = pneg %p62
        %p409 = scmp.lt.s32.totalorder %s23, 1
        %s410 = scalar_select %p409, %s23, 1
        %s411 = scalar_lea.vmem %s2, %s410
        %p412 = pneg %p91
        %p413 = pneg %p88
        %p414 = scmp.lt.s32.totalorder %s23, 1
        %s415 = scalar_select %p414, %s23, 1
        %s416 = smul.addr %s415, 4
        %s417 = smul.addr %s416, 4
        %s418 = scalar_lea.vmem %s3, %s417
        %p419 = pneg %p117
        %p420 = pneg %p114
        %p421 = scmp.lt.s32.totalorder %s23, 1
        %s422 = scalar_select %p421, %s23, 1
        %s423 = scalar_lea.vmem %s4, %s422
        %p424 = pneg %p143
        %p425 = pneg %p140
        %p426 = scmp.lt.s32.totalorder %s23, 1
        %s427 = scalar_select %p426, %s23, 1
        %s428 = smul.addr %s427, 4
        %s429 = scalar_lea.vmem %s5, %s428
        %p430 = pneg %p169
        %p431 = pneg %p166
        %p432 = scmp.lt.s32.totalorder %s23, 1
        %s433 = scalar_select %p432, %s23, 1
        %s434 = smul.addr %s433, 4
        %s435 = smul.addr %s434, 4
        %s436 = scalar_lea.vmem %s6, %s435
        %p437 = pneg %p195
        %p438 = pneg %p192
        %p439 = scmp.lt.s32.totalorder %s23, 1
        %s440 = scalar_select %p439, %s23, 1
        %s441 = scalar_lea.vmem %s7, %s440
        %p442 = pneg %p221
        %p443 = pneg %p218
        %p444 = scmp.lt.s32.totalorder %s23, 1
        %s445 = scalar_select %p444, %s23, 1
        %s446 = smul.addr %s445, 8
        %s447 = smul.addr %s446, 4
        %s448 = scalar_lea.vmem %s8, %s447
        %p449 = pneg %p247
        %p450 = pneg %p244
        %p451 = scmp.lt.s32.totalorder %s23, 1
        %s452 = scalar_select %p451, %s23, 1
        %s453 = scalar_lea.vmem %s9, %s452
        %p454 = pneg %p273
        %p455 = pneg %p270
        %p456 = pneg %p294
        %p457 = pneg %p291
        %p458 = scmp.lt.s32.totalorder %s23, 1
        %s459 = scalar_select %p458, %s23, 1
        %s460 = smul.addr %s459, 4
        %s461 = smul.addr %s460, 4
        %s462 = scalar_lea.vmem %s1, %s461
        %p463 = scmp.lt.s32.totalorder %s23, 1
        %s464 = scalar_select %p463, %s23, 1
        %s465 = scalar_lea.vmem %s2, %s464
        %p466 = scmp.lt.s32.totalorder %s23, 1
        %s467 = scalar_select %p466, %s23, 1
        %s468 = smul.addr %s467, 4
        %s469 = smul.addr %s468, 4
        %s470 = scalar_lea.vmem %s3, %s469
        %p471 = scmp.lt.s32.totalorder %s23, 1
        %s472 = scalar_select %p471, %s23, 1
        %s473 = scalar_lea.vmem %s4, %s472
        %p474 = scmp.lt.s32.totalorder %s23, 1
        %s475 = scalar_select %p474, %s23, 1
        %s476 = smul.addr %s475, 4
        %s477 = scalar_lea.vmem %s5, %s476
        %p478 = scmp.lt.s32.totalorder %s23, 1
        %s479 = scalar_select %p478, %s23, 1
        %s480 = smul.addr %s479, 4
        %s481 = smul.addr %s480, 4
        %s482 = scalar_lea.vmem %s6, %s481
        %p483 = scmp.lt.s32.totalorder %s23, 1
        %s484 = scalar_select %p483, %s23, 1
        %s485 = scalar_lea.vmem %s7, %s484
        %p486 = scmp.lt.s32.totalorder %s23, 1
        %s487 = scalar_select %p486, %s23, 1
        %s488 = smul.addr %s487, 8
        %s489 = smul.addr %s488, 4
        %s490 = scalar_lea.vmem %s8, %s489
        %p491 = scmp.lt.s32.totalorder %s23, 1
        %s492 = scalar_select %p491, %s23, 1
        %s493 = scalar_lea.vmem %s9, %s492
        %p495 = scmp.eq.s32.totalorder %s23, 0
        // Predicated region
        $region65: #{tpu_custom_call.1} parent=59 // pred_check
          %p496 = pneg %p495
        $region66: #{tpu_custom_call.1} parent=59 // pred_check_branch
          %498 = sbr.rel (%p496) target = $region68
        $region67: #{tpu_custom_call.1} parent=59 // pred_region
          %v499 = vld [vmem:[#allocation3] sm:$0xff]
          %v500 = vld [vmem:[#allocation3 + $0x8] sm:$0xff]
          %vm501 = vcmask 261120
          %502 = vst.msk [vmem:[#allocation2] sm:$0xff] %vm501, %v499
          %503 = vst.msk [vmem:[#allocation2 + $0x8] sm:$0xff] %vm501, %v500
        $region68: #{tpu_custom_call.1} parent=59 // pred_fallthru
          _
        %v504 = vld [vmem:[#allocation2] sm:$0xff]
        %v505 = vld [vmem:[#allocation2 + $0x8] sm:$0xff]
        %v506 = vpack.c.bf16 %v505, %v504
        %v507 = vld [vmem:[%s462] sm:$0xf]
        %v508 = vld [vmem:[%s462 + $0x4] sm:$0xf]
        %v509 = vld [vmem:[%s462 + $0x8] sm:$0xf]
        %v510 = vld [vmem:[%s462 + $0xc] sm:$0xf]
        %v511 = vld [vmem:[%s465] sm:$0x1]
        %v513 = vlaneseq
        %v514 = vshrl.u32 %v513, 7
        %v515 = vsub.s32 0, %v514
        %v516 = vrot.slane %v511, %v515
        %v522 = vunpack.c.l.b16 %v507
        %v523 = vunpack.c.l.b16 %v508
        %v524 = vunpack.c.l.b16 %v509
        %v525 = vunpack.c.l.b16 %v510
        %v526 = vpack.c.b16 %v523, %v522
        %v527 = vpack.c.b16 %v525, %v524
        %vm530 = vcmask 261120
        %v532 = vsel %vm530, %v506, 0
        %534 = vmatprep.subr.bf16.mxu0 0
        %535 = vmatpush1.bf16.msra.mxu0 %v526
        %536 = vmatprep.subr.bf16.mxu0 0
        %537 = vmatpush1.bf16.msra.mxu0 %v527
        %538 = vmatprep.subr.bf16.mxu0 0
        %539 = vmatpush1.bf16.msra.mxu0 0
        %540 = vmatprep.subr.bf16.mxu0 0
        %541 = vmatpush1.bf16.msra.mxu0 0
        %542 = vmatprep.subr.bf16.mxu0 0
        %543 = vmatpush1.bf16.msra.mxu0 0
        %544 = vmatprep.subr.bf16.mxu0 0
        %545 = vmatpush1.bf16.msra.mxu0 0
        %546 = vmatprep.subr.bf16.mxu0 0
        %547 = vmatpush1.bf16.msra.mxu0 0
        %548 = vmatprep.subr.bf16.mxu0 0
        %549 = vmatpush1.bf16.msra.mxu0 0
        %550 = vmatprep.subr.bf16.mxu0 0
        %551 = vmatpush1.bf16.msra.mxu0 0
        %552 = vmatprep.subr.bf16.mxu0 0
        %553 = vmatpush1.bf16.msra.mxu0 0
        %554 = vmatprep.subr.bf16.mxu0 0
        %555 = vmatpush1.bf16.msra.mxu0 0
        %556 = vmatprep.subr.bf16.mxu0 0
        %557 = vmatpush1.bf16.msra.mxu0 0
        %558 = vmatprep.subr.bf16.mxu0 0
        %559 = vmatpush1.bf16.msra.mxu0 0
        %560 = vmatprep.subr.bf16.mxu0 0
        %561 = vmatpush1.bf16.msra.mxu0 0
        %562 = vmatprep.subr.bf16.mxu0 0
        %563 = vmatpush1.bf16.msra.mxu0 0
        %564 = vmatprep.subr.bf16.mxu0 0
        %565 = vmatpush1.bf16.msra.mxu0 0
        %566 = vmatprep.mubr.bf16.mxu0 0
        %567 = vmatmul.mubr.bf16.gmra.mrb[0].mxu0 %v532
        %v568 = vpop.f32.mrb[0].mxu0
        %v569 = vadd.f32 %v516, %v568
        %v570 = vpop.f32.mrb[0].mxu0
        %v571 = vpop.f32.mrb[0].mxu0
        %v572 = vadd.f32 %v516, %v571
        %v573 = vpop.f32.mrb[0].mxu0
        %574 = vdwg.mxu0
        %v575 = vmul.f32 %v569, 0.35355338
        %v576 = vmul.f32 %v572, 0.35355338
        %v577 = vpack.c.bf16 %v569, %v569
        %v578 = vpack.c.bf16 %v572, %v572
        %v579 = vlaneseq
        %v580 = vand.u32 %v579, 127
        %vm581 = vcmp.ge.s32.totalorder %v580, 0
        %vm582 = vcmp.lt.s32.totalorder %v580, 8
        %vm583 = vmand %vm581, %vm582
        %v584 = vsel %vm583, 1, 0
        %vm585 = vcmp.eq.s32.totalorder %v584, 1
        %v586 = vsel %vm585, %v575, 0.0
        %v587 = vsel %vm585, %v576, 0.0
        %v588 = vpack.c.bf16 %v586, %v586
        %v589 = vpack.c.bf16 %v587, %v587
        %591 = vrot.lane.b32.xlu0 %v577, 96
        %v592 = vpop.permute.xlu0 %591
        %v594 = vsel %vm530, %v588, 0
        %v597 = vsel %vm530, %v592, 0
        %599 = vmatprep.subr.bf16.mxu0 0
        %600 = vmatpush1.bf16.xpose.msra.mxu0 %v597
        %601 = vmatprep.subr.bf16.mxu0 0
        %602 = vmatpush1.bf16.xpose.msra.mxu0 0
        %603 = vmatprep.subr.bf16.mxu0 0
        %604 = vmatpush1.bf16.xpose.msra.mxu0 0
        %605 = vmatprep.subr.bf16.mxu0 0
        %606 = vmatpush1.bf16.xpose.msra.mxu0 0
        %607 = vmatprep.subr.bf16.mxu0 0
        %608 = vmatpush1.bf16.xpose.msra.mxu0 0
        %609 = vmatprep.subr.bf16.mxu0 0
        %610 = vmatpush1.bf16.xpose.msra.mxu0 0
        %611 = vmatprep.subr.bf16.mxu0 0
        %612 = vmatpush1.bf16.xpose.msra.mxu0 0
        %613 = vmatprep.subr.bf16.mxu0 0
        %614 = vmatpush1.bf16.xpose.msra.mxu0 0
        %615 = vmatprep.subr.bf16.mxu0 0
        %616 = vmatpush1.bf16.xpose.msra.mxu0 0
        %617 = vmatprep.subr.bf16.mxu0 0
        %618 = vmatpush1.bf16.xpose.msra.mxu0 0
        %619 = vmatprep.subr.bf16.mxu0 0
        %620 = vmatpush1.bf16.xpose.msra.mxu0 0
        %621 = vmatprep.subr.bf16.mxu0 0
        %622 = vmatpush1.bf16.xpose.msra.mxu0 0
        %623 = vmatprep.subr.bf16.mxu0 0
        %624 = vmatpush1.bf16.xpose.msra.mxu0 0
        %625 = vmatprep.subr.bf16.mxu0 0
        %626 = vmatpush1.bf16.xpose.msra.mxu0 0
        %627 = vmatprep.subr.bf16.mxu0 0
        %628 = vmatpush1.bf16.xpose.msra.mxu0 0
        %629 = vmatprep.subr.bf16.mxu0 0
        %630 = vmatpush1.bf16.xpose.msra.mxu0 0
        %631 = vmatprep.mubr.bf16.mxu0 0
        %632 = vmatmul.mubr.bf16.gmra.mrb[0].mxu0 %v594
        %v633 = vpop.f32.mrb[0].mxu0
        %v634 = vadd.f32 0.0, %v633
        %v635 = vpop.f32.mrb[0].mxu0
        %v636 = vpop.f32.mrb[0].mxu0
        %v637 = vpop.f32.mrb[0].mxu0
        %638 = vdwg.mxu0
        %640 = vrot.lane.b32.xlu0 %v578, 96
        %v641 = vpop.permute.xlu0 %640
        %v643 = vsel %vm530, %v589, 0
        %v646 = vsel %vm530, %v641, 0
        %648 = vmatprep.subr.bf16.mxu0 0
        %649 = vmatpush1.bf16.xpose.msra.mxu0 %v646
        %650 = vmatprep.subr.bf16.mxu0 0
        %651 = vmatpush1.bf16.xpose.msra.mxu0 0
        %652 = vmatprep.subr.bf16.mxu0 0
        %653 = vmatpush1.bf16.xpose.msra.mxu0 0
        %654 = vmatprep.subr.bf16.mxu0 0
        %655 = vmatpush1.bf16.xpose.msra.mxu0 0
        %656 = vmatprep.subr.bf16.mxu0 0
        %657 = vmatpush1.bf16.xpose.msra.mxu0 0
        %658 = vmatprep.subr.bf16.mxu0 0
        %659 = vmatpush1.bf16.xpose.msra.mxu0 0
        %660 = vmatprep.subr.bf16.mxu0 0
        %661 = vmatpush1.bf16.xpose.msra.mxu0 0
        %662 = vmatprep.subr.bf16.mxu0 0
        %663 = vmatpush1.bf16.xpose.msra.mxu0 0
        %664 = vmatprep.subr.bf16.mxu0 0
        %665 = vmatpush1.bf16.xpose.msra.mxu0 0
        %666 = vmatprep.subr.bf16.mxu0 0
        %667 = vmatpush1.bf16.xpose.msra.mxu0 0
        %668 = vmatprep.subr.bf16.mxu0 0
        %669 = vmatpush1.bf16.xpose.msra.mxu0 0
        %670 = vmatprep.subr.bf16.mxu0 0
        %671 = vmatpush1.bf16.xpose.msra.mxu0 0
        %672 = vmatprep.subr.bf16.mxu0 0
        %673 = vmatpush1.bf16.xpose.msra.mxu0 0
        %674 = vmatprep.subr.bf16.mxu0 0
        %675 = vmatpush1.bf16.xpose.msra.mxu0 0
        %676 = vmatprep.subr.bf16.mxu0 0
        %677 = vmatpush1.bf16.xpose.msra.mxu0 0
        %678 = vmatprep.subr.bf16.mxu0 0
        %679 = vmatpush1.bf16.xpose.msra.mxu0 0
        %680 = vmatprep.mubr.bf16.mxu0 0
        %681 = vmatmul.mubr.bf16.gmra.mrb[0].mxu0 %v643
        %v682 = vpop.f32.mrb[0].mxu0
        %v683 = vadd.f32 0.0, %v682
        %v684 = vpop.f32.mrb[0].mxu0
        %v685 = vpop.f32.mrb[0].mxu0
        %v686 = vpop.f32.mrb[0].mxu0
        %687 = vdwg.mxu0
        %vm688 = vcmask 64512
        %v689 = vsel %vm688, %v634, -inf
        %690 = vmax.xlane.f32.xlu0 %v689
        %v691 = vpop.xlane.xlu0 %690
        %v692 = vsel %vm688, %v683, -inf
        %693 = vmax.xlane.f32.xlu0 %v692
        %v694 = vpop.xlane.xlu0 %693
        %v695 = vsub.f32 %v634, %v691
        %v696 = vsub.f32 %v683, %v694
        %v697 = vmul.f32 %v695, 1.442695
        %v698 = vpow.pop %v697
        %v699 = vmul.f32 %v696, 1.442695
        %v700 = vpow.pop %v699
        %v701 = vsel %vm688, %v698, 0.0
        %702 = vadd.xlane.f32.xlu0 %v701
        %v703 = vpop.xlane.xlu0 %702
        %v704 = vsel %vm688, %v700, 0.0
        %705 = vadd.xlane.f32.xlu0 %v704
        %v706 = vpop.xlane.xlu0 %705
        %v707 = vrcp.pop %v703
        %v708 = vrcp.pop %v706
        %v709 = vmul.f32 %v698, %v707
        %v710 = vmul.f32 %v700, %v708
        %713 = vrot.lane.b32.xlu0 %v569, 64
        %v714 = vpop.permute.xlu0 %713
        %715 = vrot.lane.b32.xlu0 %v572, 64
        %v716 = vpop.permute.xlu0 %715
        %v719 = vsel %vm585, %v714, 0.0
        %v720 = vsel %vm585, %v716, 0.0
        %v721 = vpack.c.bf16 %v719, %v719
        %v722 = vpack.c.bf16 %v720, %v720
        %v723 = vpack.c.bf16 %v709, %v709
        %v724 = vpack.c.bf16 %v710, %v710
        %vm725 = vcmp.ge.s32.totalorder %v580, 8
        %vm726 = vcmp.lt.s32.totalorder %v580, 16
        %vm727 = vmand %vm725, %vm726
        %v728 = vsel %vm727, 1, 0
        %vm729 = vcmp.eq.s32.totalorder %v728, 1
        %v730 = vsel %vm729, %v575, 0.0
        %v731 = vsel %vm729, %v576, 0.0
        %v732 = vpack.c.bf16 %v730, %v730
        %v733 = vpack.c.bf16 %v731, %v731
        %v735 = vsel %vm530, %v732, 0
        %737 = vmatprep.subr.bf16.mxu0 0
        %738 = vmatpush1.bf16.xpose.msra.mxu0 %v597
        %739 = vmatprep.subr.bf16.mxu0 0
        %740 = vmatpush1.bf16.xpose.msra.mxu0 0
        %741 = vmatprep.subr.bf16.mxu0 0
        %742 = vmatpush1.bf16.xpose.msra.mxu0 0
        %743 = vmatprep.subr.bf16.mxu0 0
        %744 = vmatpush1.bf16.xpose.msra.mxu0 0
        %745 = vmatprep.subr.bf16.mxu0 0
        %746 = vmatpush1.bf16.xpose.msra.mxu0 0
        %747 = vmatprep.subr.bf16.mxu0 0
        %748 = vmatpush1.bf16.xpose.msra.mxu0 0
        %749 = vmatprep.subr.bf16.mxu0 0
        %750 = vmatpush1.bf16.xpose.msra.mxu0 0
        %751 = vmatprep.subr.bf16.mxu0 0
        %752 = vmatpush1.bf16.xpose.msra.mxu0 0
        %753 = vmatprep.subr.bf16.mxu0 0
        %754 = vmatpush1.bf16.xpose.msra.mxu0 0
        %755 = vmatprep.subr.bf16.mxu0 0
        %756 = vmatpush1.bf16.xpose.msra.mxu0 0
        %757 = vmatprep.subr.bf16.mxu0 0
        %758 = vmatpush1.bf16.xpose.msra.mxu0 0
        %759 = vmatprep.subr.bf16.mxu0 0
        %760 = vmatpush1.bf16.xpose.msra.mxu0 0
        %761 = vmatprep.subr.bf16.mxu0 0
        %762 = vmatpush1.bf16.xpose.msra.mxu0 0
        %763 = vmatprep.subr.bf16.mxu0 0
        %764 = vmatpush1.bf16.xpose.msra.mxu0 0
        %765 = vmatprep.subr.bf16.mxu0 0
        %766 = vmatpush1.bf16.xpose.msra.mxu0 0
        %767 = vmatprep.subr.bf16.mxu0 0
        %768 = vmatpush1.bf16.xpose.msra.mxu0 0
        %769 = vmatprep.mubr.bf16.mxu0 0
        %770 = vmatmul.mubr.bf16.gmra.mrb[0].mxu0 %v735
        %v771 = vpop.f32.mrb[0].mxu0
        %v772 = vadd.f32 0.0, %v771
        %v773 = vpop.f32.mrb[0].mxu0
        %v774 = vpop.f32.mrb[0].mxu0
        %v775 = vpop.f32.mrb[0].mxu0
        %776 = vdwg.mxu0
        %v778 = vsel %vm530, %v733, 0
        %780 = vmatprep.subr.bf16.mxu0 0
        %781 = vmatpush1.bf16.xpose.msra.mxu0 %v646
        %782 = vmatprep.subr.bf16.mxu0 0
        %783 = vmatpush1.bf16.xpose.msra.mxu0 0
        %784 = vmatprep.subr.bf16.mxu0 0
        %785 = vmatpush1.bf16.xpose.msra.mxu0 0
        %786 = vmatprep.subr.bf16.mxu0 0
        %787 = vmatpush1.bf16.xpose.msra.mxu0 0
        %788 = vmatprep.subr.bf16.mxu0 0
        %789 = vmatpush1.bf16.xpose.msra.mxu0 0
        %790 = vmatprep.subr.bf16.mxu0 0
        %791 = vmatpush1.bf16.xpose.msra.mxu0 0
        %792 = vmatprep.subr.bf16.mxu0 0
        %793 = vmatpush1.bf16.xpose.msra.mxu0 0
        %794 = vmatprep.subr.bf16.mxu0 0
        %795 = vmatpush1.bf16.xpose.msra.mxu0 0
        %796 = vmatprep.subr.bf16.mxu0 0
        %797 = vmatpush1.bf16.xpose.msra.mxu0 0
        %798 = vmatprep.subr.bf16.mxu0 0
        %799 = vmatpush1.bf16.xpose.msra.mxu0 0
        %800 = vmatprep.subr.bf16.mxu0 0
        %801 = vmatpush1.bf16.xpose.msra.mxu0 0
        %802 = vmatprep.subr.bf16.mxu0 0
        %803 = vmatpush1.bf16.xpose.msra.mxu0 0
        %804 = vmatprep.subr.bf16.mxu0 0
        %805 = vmatpush1.bf16.xpose.msra.mxu0 0
        %806 = vmatprep.subr.bf16.mxu0 0
        %807 = vmatpush1.bf16.xpose.msra.mxu0 0
        %808 = vmatprep.subr.bf16.mxu0 0
        %809 = vmatpush1.bf16.xpose.msra.mxu0 0
        %810 = vmatprep.subr.bf16.mxu0 0
        %811 = vmatpush1.bf16.xpose.msra.mxu0 0
        %812 = vmatprep.mubr.bf16.mxu0 0
        %813 = vmatmul.mubr.bf16.gmra.mrb[0].mxu0 %v778
        %v814 = vpop.f32.mrb[0].mxu0
        %v815 = vadd.f32 0.0, %v814
        %v816 = vpop.f32.mrb[0].mxu0
        %v817 = vpop.f32.mrb[0].mxu0
        %v818 = vpop.f32.mrb[0].mxu0
        %819 = vdwg.mxu0
        %v820 = vsel %vm688, %v772, -inf
        %821 = vmax.xlane.f32.xlu0 %v820
        %v822 = vpop.xlane.xlu0 %821
        %v823 = vsel %vm688, %v815, -inf
        %824 = vmax.xlane.f32.xlu0 %v823
        %v825 = vpop.xlane.xlu0 %824
        %v826 = vsub.f32 %v772, %v822
        %v827 = vsub.f32 %v815, %v825
        %v828 = vmul.f32 %v826, 1.442695
        %v829 = vpow.pop %v828
        %v830 = vmul.f32 %v827, 1.442695
        %v831 = vpow.pop %v830
        %v832 = vsel %vm688, %v829, 0.0
        %833 = vadd.xlane.f32.xlu0 %v832
        %v834 = vpop.xlane.xlu0 %833
        %v835 = vsel %vm688, %v831, 0.0
        %836 = vadd.xlane.f32.xlu0 %v835
        %v837 = vpop.xlane.xlu0 %836
        %v838 = vrcp.pop %v834
        %v839 = vrcp.pop %v837
        %v840 = vmul.f32 %v829, %v838
        %v841 = vmul.f32 %v831, %v839
        %v842 = vsel %vm729, %v714, 0.0
        %v843 = vsel %vm729, %v716, 0.0
        %v844 = vpack.c.bf16 %v842, %v842
        %v845 = vpack.c.bf16 %v843, %v843
        %v846 = vpack.c.bf16 %v840, %v840
        %v847 = vpack.c.bf16 %v841, %v841
        %v849 = vsel %vm688, %v846, 0
        %vm851 = vcmask 1043456
        %v853 = vsel %vm851, %v844, 0
        %855 = vmatprep.subr.bf16.mxu0 0
        %856 = vmatpush1.bf16.msra.mxu0 %v853
        %857 = vmatprep.subr.bf16.mxu0 0
        %858 = vmatpush1.bf16.msra.mxu0 0
        %859 = vmatprep.subr.bf16.mxu0 0
        %860 = vmatpush1.bf16.msra.mxu0 0
        %861 = vmatprep.subr.bf16.mxu0 0
        %862 = vmatpush1.bf16.msra.mxu0 0
        %863 = vmatprep.subr.bf16.mxu0 0
        %864 = vmatpush1.bf16.msra.mxu0 0
        %865 = vmatprep.subr.bf16.mxu0 0
        %866 = vmatpush1.bf16.msra.mxu0 0
        %867 = vmatprep.subr.bf16.mxu0 0
        %868 = vmatpush1.bf16.msra.mxu0 0
        %869 = vmatprep.subr.bf16.mxu0 0
        %870 = vmatpush1.bf16.msra.mxu0 0
        %871 = vmatprep.subr.bf16.mxu0 0
        %872 = vmatpush1.bf16.msra.mxu0 0
        %873 = vmatprep.subr.bf16.mxu0 0
        %874 = vmatpush1.bf16.msra.mxu0 0
        %875 = vmatprep.subr.bf16.mxu0 0
        %876 = vmatpush1.bf16.msra.mxu0 0
        %877 = vmatprep.subr.bf16.mxu0 0
        %878 = vmatpush1.bf16.msra.mxu0 0
        %879 = vmatprep.subr.bf16.mxu0 0
        %880 = vmatpush1.bf16.msra.mxu0 0
        %881 = vmatprep.subr.bf16.mxu0 0
        %882 = vmatpush1.bf16.msra.mxu0 0
        %883 = vmatprep.subr.bf16.mxu0 0
        %884 = vmatpush1.bf16.msra.mxu0 0
        %885 = vmatprep.subr.bf16.mxu0 0
        %886 = vmatpush1.bf16.msra.mxu0 0
        %887 = vmatprep.mubr.bf16.mxu0 0
        %888 = vmatmul.mubr.bf16.gmra.mrb[0].mxu0 %v849
        %v889 = vpop.f32.mrb[0].mxu0
        %v890 = vadd.f32 0.0, %v889
        %v891 = vpop.f32.mrb[0].mxu0
        %v892 = vpop.f32.mrb[0].mxu0
        %v893 = vpop.f32.mrb[0].mxu0
        %894 = vdwg.mxu0
        %v896 = vsel %vm688, %v847, 0
        %v899 = vsel %vm851, %v845, 0
        %901 = vmatprep.subr.bf16.mxu0 0
        %902 = vmatpush1.bf16.msra.mxu0 %v899
        %903 = vmatprep.subr.bf16.mxu0 0
        %904 = vmatpush1.bf16.msra.mxu0 0
        %905 = vmatprep.subr.bf16.mxu0 0
        %906 = vmatpush1.bf16.msra.mxu0 0
        %907 = vmatprep.subr.bf16.mxu0 0
        %908 = vmatpush1.bf16.msra.mxu0 0
        %909 = vmatprep.subr.bf16.mxu0 0
        %910 = vmatpush1.bf16.msra.mxu0 0
        %911 = vmatprep.subr.bf16.mxu0 0
        %912 = vmatpush1.bf16.msra.mxu0 0
        %913 = vmatprep.subr.bf16.mxu0 0
        %914 = vmatpush1.bf16.msra.mxu0 0
        %915 = vmatprep.subr.bf16.mxu0 0
        %916 = vmatpush1.bf16.msra.mxu0 0
        %917 = vmatprep.subr.bf16.mxu0 0
        %918 = vmatpush1.bf16.msra.mxu0 0
        %919 = vmatprep.subr.bf16.mxu0 0
        %920 = vmatpush1.bf16.msra.mxu0 0
        %921 = vmatprep.subr.bf16.mxu0 0
        %922 = vmatpush1.bf16.msra.mxu0 0
        %923 = vmatprep.subr.bf16.mxu0 0
        %924 = vmatpush1.bf16.msra.mxu0 0
        %925 = vmatprep.subr.bf16.mxu0 0
        %926 = vmatpush1.bf16.msra.mxu0 0
        %927 = vmatprep.subr.bf16.mxu0 0
        %928 = vmatpush1.bf16.msra.mxu0 0
        %929 = vmatprep.subr.bf16.mxu0 0
        %930 = vmatpush1.bf16.msra.mxu0 0
        %931 = vmatprep.subr.bf16.mxu0 0
        %932 = vmatpush1.bf16.msra.mxu0 0
        %933 = vmatprep.mubr.bf16.mxu0 0
        %934 = vmatmul.mubr.bf16.gmra.mrb[0].mxu0 %v896
        %v935 = vpop.f32.mrb[0].mxu0
        %v936 = vadd.f32 0.0, %v935
        %v937 = vpop.f32.mrb[0].mxu0
        %v938 = vpop.f32.mrb[0].mxu0
        %v939 = vpop.f32.mrb[0].mxu0
        %940 = vdwg.mxu0
        %v942 = vsel %vm688, %v723, 0
        %v945 = vsel %vm851, %v721, 0
        %947 = vmatprep.subr.bf16.mxu0 0
        %948 = vmatpush1.bf16.msra.mxu0 %v945
        %949 = vmatprep.subr.bf16.mxu0 0
        %950 = vmatpush1.bf16.msra.mxu0 0
        %951 = vmatprep.subr.bf16.mxu0 0
        %952 = vmatpush1.bf16.msra.mxu0 0
        %953 = vmatprep.subr.bf16.mxu0 0
        %954 = vmatpush1.bf16.msra.mxu0 0
        %955 = vmatprep.subr.bf16.mxu0 0
        %956 = vmatpush1.bf16.msra.mxu0 0
        %957 = vmatprep.subr.bf16.mxu0 0
        %958 = vmatpush1.bf16.msra.mxu0 0
        %959 = vmatprep.subr.bf16.mxu0 0
        %960 = vmatpush1.bf16.msra.mxu0 0
        %961 = vmatprep.subr.bf16.mxu0 0
        %962 = vmatpush1.bf16.msra.mxu0 0
        %963 = vmatprep.subr.bf16.mxu0 0
        %964 = vmatpush1.bf16.msra.mxu0 0
        %965 = vmatprep.subr.bf16.mxu0 0
        %966 = vmatpush1.bf16.msra.mxu0 0
        %967 = vmatprep.subr.bf16.mxu0 0
        %968 = vmatpush1.bf16.msra.mxu0 0
        %969 = vmatprep.subr.bf16.mxu0 0
        %970 = vmatpush1.bf16.msra.mxu0 0
        %971 = vmatprep.subr.bf16.mxu0 0
        %972 = vmatpush1.bf16.msra.mxu0 0
        %973 = vmatprep.subr.bf16.mxu0 0
        %974 = vmatpush1.bf16.msra.mxu0 0
        %975 = vmatprep.subr.bf16.mxu0 0
        %976 = vmatpush1.bf16.msra.mxu0 0
        %977 = vmatprep.subr.bf16.mxu0 0
        %978 = vmatpush1.bf16.msra.mxu0 0
        %979 = vmatprep.mubr.bf16.mxu0 0
        %980 = vmatmul.mubr.bf16.gmra.mrb[0].mxu0 %v942
        %v981 = vpop.f32.mrb[0].mxu0
        %v982 = vadd.f32 %v890, %v981
        %v983 = vpop.f32.mrb[0].mxu0
        %v984 = vpop.f32.mrb[0].mxu0
        %v985 = vpop.f32.mrb[0].mxu0
        %986 = vdwg.mxu0
        %v988 = vsel %vm688, %v724, 0
        %v991 = vsel %vm851, %v722, 0
        %993 = vmatprep.subr.bf16.mxu0 0
        %994 = vmatpush1.bf16.msra.mxu0 %v991
        %995 = vmatprep.subr.bf16.mxu0 0
        %996 = vmatpush1.bf16.msra.mxu0 0
        %997 = vmatprep.subr.bf16.mxu0 0
        %998 = vmatpush1.bf16.msra.mxu0 0
        %999 = vmatprep.subr.bf16.mxu0 0
        %1000 = vmatpush1.bf16.msra.mxu0 0
        %1001 = vmatprep.subr.bf16.mxu0 0
        %1002 = vmatpush1.bf16.msra.mxu0 0
        %1003 = vmatprep.subr.bf16.mxu0 0
        %1004 = vmatpush1.bf16.msra.mxu0 0
        %1005 = vmatprep.subr.bf16.mxu0 0
        %1006 = vmatpush1.bf16.msra.mxu0 0
        %1007 = vmatprep.subr.bf16.mxu0 0
        %1008 = vmatpush1.bf16.msra.mxu0 0
        %1009 = vmatprep.subr.bf16.mxu0 0
        %1010 = vmatpush1.bf16.msra.mxu0 0
        %1011 = vmatprep.subr.bf16.mxu0 0
        %1012 = vmatpush1.bf16.msra.mxu0 0
        %1013 = vmatprep.subr.bf16.mxu0 0
        %1014 = vmatpush1.bf16.msra.mxu0 0
        %1015 = vmatprep.subr.bf16.mxu0 0
        %1016 = vmatpush1.bf16.msra.mxu0 0
        %1017 = vmatprep.subr.bf16.mxu0 0
        %1018 = vmatpush1.bf16.msra.mxu0 0
        %1019 = vmatprep.subr.bf16.mxu0 0
        %1020 = vmatpush1.bf16.msra.mxu0 0
        %1021 = vmatprep.subr.bf16.mxu0 0
        %1022 = vmatpush1.bf16.msra.mxu0 0
        %1023 = vmatprep.subr.bf16.mxu0 0
        %1024 = vmatpush1.bf16.msra.mxu0 0
        %1025 = vmatprep.mubr.bf16.mxu0 0
        %1026 = vmatmul.mubr.bf16.gmra.mrb[0].mxu0 %v988
        %v1027 = vpop.f32.mrb[0].mxu0
        %v1028 = vadd.f32 %v936, %v1027
        %v1029 = vpop.f32.mrb[0].mxu0
        %v1030 = vpop.f32.mrb[0].mxu0
        %v1031 = vpop.f32.mrb[0].mxu0
        %1032 = vdwg.mxu0
        %vm1033 = vcmp.ge.s32.totalorder %v580, 16
        %vm1034 = vcmp.lt.s32.totalorder %v580, 24
        %vm1035 = vmand %vm1033, %vm1034
        %v1036 = vsel %vm1035, 1, 0
        %vm1037 = vcmp.eq.s32.totalorder %v1036, 1
        %v1038 = vsel %vm1037, %v575, 0.0
        %v1039 = vsel %vm1037, %v576, 0.0
        %v1040 = vpack.c.bf16 %v1038, %v1038
        %v1041 = vpack.c.bf16 %v1039, %v1039
        %v1043 = vsel %vm530, %v1040, 0
        %1045 = vmatprep.subr.bf16.mxu0 0
        %1046 = vmatpush1.bf16.xpose.msra.mxu0 %v597
        %1047 = vmatprep.subr.bf16.mxu0 0
        %1048 = vmatpush1.bf16.xpose.msra.mxu0 0
        %1049 = vmatprep.subr.bf16.mxu0 0
        %1050 = vmatpush1.bf16.xpose.msra.mxu0 0
        %1051 = vmatprep.subr.bf16.mxu0 0
        %1052 = vmatpush1.bf16.xpose.msra.mxu0 0
        %1053 = vmatprep.subr.bf16.mxu0 0
        %1054 = vmatpush1.bf16.xpose.msra.mxu0 0
        %1055 = vmatprep.subr.bf16.mxu0 0
        %1056 = vmatpush1.bf16.xpose.msra.mxu0 0
        %1057 = vmatprep.subr.bf16.mxu0 0
        %1058 = vmatpush1.bf16.xpose.msra.mxu0 0
        %1059 = vmatprep.subr.bf16.mxu0 0
        %1060 = vmatpush1.bf16.xpose.msra.mxu0 0
        %1061 = vmatprep.subr.bf16.mxu0 0
        %1062 = vmatpush1.bf16.xpose.msra.mxu0 0
        %1063 = vmatprep.subr.bf16.mxu0 0
        %1064 = vmatpush1.bf16.xpose.msra.mxu0 0
        %1065 = vmatprep.subr.bf16.mxu0 0
        %1066 = vmatpush1.bf16.xpose.msra.mxu0 0
        %1067 = vmatprep.subr.bf16.mxu0 0
        %1068 = vmatpush1.bf16.xpose.msra.mxu0 0
        %1069 = vmatprep.subr.bf16.mxu0 0
        %1070 = vmatpush1.bf16.xpose.msra.mxu0 0
        %1071 = vmatprep.subr.bf16.mxu0 0
        %1072 = vmatpush1.bf16.xpose.msra.mxu0 0
        %1073 = vmatprep.subr.bf16.mxu0 0
        %1074 = vmatpush1.bf16.xpose.msra.mxu0 0
        %1075 = vmatprep.subr.bf16.mxu0 0
        %1076 = vmatpush1.bf16.xpose.msra.mxu0 0
        %1077 = vmatprep.mubr.bf16.mxu0 0
        %1078 = vmatmul.mubr.bf16.gmra.mrb[0].mxu0 %v1043
        %v1079 = vpop.f32.mrb[0].mxu0
        %v1080 = vadd.f32 0.0, %v1079
        %v1081 = vpop.f32.mrb[0].mxu0
        %v1082 = vpop.f32.mrb[0].mxu0
        %v1083 = vpop.f32.mrb[0].mxu0
        %1084 = vdwg.mxu0
        %v1086 = vsel %vm530, %v1041, 0
        %1088 = vmatprep.subr.bf16.mxu0 0
        %1089 = vmatpush1.bf16.xpose.msra.mxu0 %v646
        %1090 = vmatprep.subr.bf16.mxu0 0
        %1091 = vmatpush1.bf16.xpose.msra.mxu0 0
        %1092 = vmatprep.subr.bf16.mxu0 0
        %1093 = vmatpush1.bf16.xpose.msra.mxu0 0
        %1094 = vmatprep.subr.bf16.mxu0 0
        %1095 = vmatpush1.bf16.xpose.msra.mxu0 0
        %1096 = vmatprep.subr.bf16.mxu0 0
        %1097 = vmatpush1.bf16.xpose.msra.mxu0 0
        %1098 = vmatprep.subr.bf16.mxu0 0
        %1099 = vmatpush1.bf16.xpose.msra.mxu0 0
        %1100 = vmatprep.subr.bf16.mxu0 0
        %1101 = vmatpush1.bf16.xpose.msra.mxu0 0
        %1102 = vmatprep.subr.bf16.mxu0 0
        %1103 = vmatpush1.bf16.xpose.msra.mxu0 0
        %1104 = vmatprep.subr.bf16.mxu0 0
        %1105 = vmatpush1.bf16.xpose.msra.mxu0 0
        %1106 = vmatprep.subr.bf16.mxu0 0
        %1107 = vmatpush1.bf16.xpose.msra.mxu0 0
        %1108 = vmatprep.subr.bf16.mxu0 0
        %1109 = vmatpush1.bf16.xpose.msra.mxu0 0
        %1110 = vmatprep.subr.bf16.mxu0 0
        %1111 = vmatpush1.bf16.xpose.msra.mxu0 0
        %1112 = vmatprep.subr.bf16.mxu0 0
        %1113 = vmatpush1.bf16.xpose.msra.mxu0 0
        %1114 = vmatprep.subr.bf16.mxu0 0
        %1115 = vmatpush1.bf16.xpose.msra.mxu0 0
        %1116 = vmatprep.subr.bf16.mxu0 0
        %1117 = vmatpush1.bf16.xpose.msra.mxu0 0
        %1118 = vmatprep.subr.bf16.mxu0 0
        %1119 = vmatpush1.bf16.xpose.msra.mxu0 0
        %1120 = vmatprep.mubr.bf16.mxu0 0
        %1121 = vmatmul.mubr.bf16.gmra.mrb[0].mxu0 %v1086
        %v1122 = vpop.f32.mrb[0].mxu0
        %v1123 = vadd.f32 0.0, %v1122
        %v1124 = vpop.f32.mrb[0].mxu0
        %v1125 = vpop.f32.mrb[0].mxu0
        %v1126 = vpop.f32.mrb[0].mxu0
        %1127 = vdwg.mxu0
        %v1128 = vsel %vm688, %v1080, -inf
        %1129 = vmax.xlane.f32.xlu0 %v1128
        %v1130 = vpop.xlane.xlu0 %1129
        %v1131 = vsel %vm688, %v1123, -inf
        %1132 = vmax.xlane.f32.xlu0 %v1131
        %v1133 = vpop.xlane.xlu0 %1132
        %v1134 = vsub.f32 %v1080, %v1130
        %v1135 = vsub.f32 %v1123, %v1133
        %v1136 = vmul.f32 %v1134, 1.442695
        %v1137 = vpow.pop %v1136
        %v1138 = vmul.f32 %v1135, 1.442695
        %v1139 = vpow.pop %v1138
        %v1140 = vsel %vm688, %v1137, 0.0
        %1141 = vadd.xlane.f32.xlu0 %v1140
        %v1142 = vpop.xlane.xlu0 %1141
        %v1143 = vsel %vm688, %v1139, 0.0
        %1144 = vadd.xlane.f32.xlu0 %v1143
        %v1145 = vpop.xlane.xlu0 %1144
        %v1146 = vrcp.pop %v1142
        %v1147 = vrcp.pop %v1145
        %v1148 = vmul.f32 %v1137, %v1146
        %v1149 = vmul.f32 %v1139, %v1147
        %v1150 = vsel %vm1037, %v714, 0.0
        %v1151 = vsel %vm1037, %v716, 0.0
        %v1152 = vpack.c.bf16 %v1150, %v1150
        %v1153 = vpack.c.bf16 %v1151, %v1151
        %v1154 = vpack.c.bf16 %v1148, %v1148
        %v1155 = vpack.c.bf16 %v1149, %v1149
        %v1157 = vsel %vm688, %v1154, 0
        %v1160 = vsel %vm851, %v1152, 0
        %1162 = vmatprep.subr.bf16.mxu0 0
        %1163 = vmatpush1.bf16.msra.mxu0 %v1160
        %1164 = vmatprep.subr.bf16.mxu0 0
        %1165 = vmatpush1.bf16.msra.mxu0 0
        %1166 = vmatprep.subr.bf16.mxu0 0
        %1167 = vmatpush1.bf16.msra.mxu0 0
        %1168 = vmatprep.subr.bf16.mxu0 0
        %1169 = vmatpush1.bf16.msra.mxu0 0
        %1170 = vmatprep.subr.bf16.mxu0 0
        %1171 = vmatpush1.bf16.msra.mxu0 0
        %1172 = vmatprep.subr.bf16.mxu0 0
        %1173 = vmatpush1.bf16.msra.mxu0 0
        %1174 = vmatprep.subr.bf16.mxu0 0
        %1175 = vmatpush1.bf16.msra.mxu0 0
        %1176 = vmatprep.subr.bf16.mxu0 0
        %1177 = vmatpush1.bf16.msra.mxu0 0
        %1178 = vmatprep.subr.bf16.mxu0 0
        %1179 = vmatpush1.bf16.msra.mxu0 0
        %1180 = vmatprep.subr.bf16.mxu0 0
        %1181 = vmatpush1.bf16.msra.mxu0 0
        %1182 = vmatprep.subr.bf16.mxu0 0
        %1183 = vmatpush1.bf16.msra.mxu0 0
        %1184 = vmatprep.subr.bf16.mxu0 0
        %1185 = vmatpush1.bf16.msra.mxu0 0
        %1186 = vmatprep.subr.bf16.mxu0 0
        %1187 = vmatpush1.bf16.msra.mxu0 0
        %1188 = vmatprep.subr.bf16.mxu0 0
        %1189 = vmatpush1.bf16.msra.mxu0 0
        %1190 = vmatprep.subr.bf16.mxu0 0
        %1191 = vmatpush1.bf16.msra.mxu0 0
        %1192 = vmatprep.subr.bf16.mxu0 0
        %1193 = vmatpush1.bf16.msra.mxu0 0
        %1194 = vmatprep.mubr.bf16.mxu0 0
        %1195 = vmatmul.mubr.bf16.gmra.mrb[0].mxu0 %v1157
        %v1196 = vpop.f32.mrb[0].mxu0
        %v1197 = vadd.f32 0.0, %v1196
        %v1198 = vpop.f32.mrb[0].mxu0
        %v1199 = vpop.f32.mrb[0].mxu0
        %v1200 = vpop.f32.mrb[0].mxu0
        %1201 = vdwg.mxu0
        %v1203 = vsel %vm688, %v1155, 0
        %v1206 = vsel %vm851, %v1153, 0
        %1208 = vmatprep.subr.bf16.mxu0 0
        %1209 = vmatpush1.bf16.msra.mxu0 %v1206
        %1210 = vmatprep.subr.bf16.mxu0 0
        %1211 = vmatpush1.bf16.msra.mxu0 0
        %1212 = vmatprep.subr.bf16.mxu0 0
        %1213 = vmatpush1.bf16.msra.mxu0 0
        %1214 = vmatprep.subr.bf16.mxu0 0
        %1215 = vmatpush1.bf16.msra.mxu0 0
        %1216 = vmatprep.subr.bf16.mxu0 0
        %1217 = vmatpush1.bf16.msra.mxu0 0
        %1218 = vmatprep.subr.bf16.mxu0 0
        %1219 = vmatpush1.bf16.msra.mxu0 0
        %1220 = vmatprep.subr.bf16.mxu0 0
        %1221 = vmatpush1.bf16.msra.mxu0 0
        %1222 = vmatprep.subr.bf16.mxu0 0
        %1223 = vmatpush1.bf16.msra.mxu0 0
        %1224 = vmatprep.subr.bf16.mxu0 0
        %1225 = vmatpush1.bf16.msra.mxu0 0
        %1226 = vmatprep.subr.bf16.mxu0 0
        %1227 = vmatpush1.bf16.msra.mxu0 0
        %1228 = vmatprep.subr.bf16.mxu0 0
        %1229 = vmatpush1.bf16.msra.mxu0 0
        %1230 = vmatprep.subr.bf16.mxu0 0
        %1231 = vmatpush1.bf16.msra.mxu0 0
        %1232 = vmatprep.subr.bf16.mxu0 0
        %1233 = vmatpush1.bf16.msra.mxu0 0
        %1234 = vmatprep.subr.bf16.mxu0 0
        %1235 = vmatpush1.bf16.msra.mxu0 0
        %1236 = vmatprep.subr.bf16.mxu0 0
        %1237 = vmatpush1.bf16.msra.mxu0 0
        %1238 = vmatprep.subr.bf16.mxu0 0
        %1239 = vmatpush1.bf16.msra.mxu0 0
        %1240 = vmatprep.mubr.bf16.mxu0 0
        %1241 = vmatmul.mubr.bf16.gmra.mrb[0].mxu0 %v1203
        %v1242 = vpop.f32.mrb[0].mxu0
        %v1243 = vadd.f32 0.0, %v1242
        %v1244 = vpop.f32.mrb[0].mxu0
        %v1245 = vpop.f32.mrb[0].mxu0
        %v1246 = vpop.f32.mrb[0].mxu0
        %1247 = vdwg.mxu0
        %v1248 = vadd.f32 %v982, %v1197
        %v1249 = vadd.f32 %v1028, %v1243
        %vm1250 = vcmp.ge.s32.totalorder %v580, 24
        %vm1251 = vcmp.lt.s32.totalorder %v580, 32
        %vm1252 = vmand %vm1250, %vm1251
        %v1253 = vsel %vm1252, 1, 0
        %vm1254 = vcmp.eq.s32.totalorder %v1253, 1
        %v1255 = vsel %vm1254, %v575, 0.0
        %v1256 = vsel %vm1254, %v576, 0.0
        %v1257 = vpack.c.bf16 %v1255, %v1255
        %v1258 = vpack.c.bf16 %v1256, %v1256
        %v1260 = vsel %vm530, %v1257, 0
        %1262 = vmatprep.subr.bf16.mxu0 0
        %1263 = vmatpush1.bf16.xpose.msra.mxu0 %v597
        %1264 = vmatprep.subr.bf16.mxu0 0
        %1265 = vmatpush1.bf16.xpose.msra.mxu0 0
        %1266 = vmatprep.subr.bf16.mxu0 0
        %1267 = vmatpush1.bf16.xpose.msra.mxu0 0
        %1268 = vmatprep.subr.bf16.mxu0 0
        %1269 = vmatpush1.bf16.xpose.msra.mxu0 0
        %1270 = vmatprep.subr.bf16.mxu0 0
        %1271 = vmatpush1.bf16.xpose.msra.mxu0 0
        %1272 = vmatprep.subr.bf16.mxu0 0
        %1273 = vmatpush1.bf16.xpose.msra.mxu0 0
        %1274 = vmatprep.subr.bf16.mxu0 0
        %1275 = vmatpush1.bf16.xpose.msra.mxu0 0
        %1276 = vmatprep.subr.bf16.mxu0 0
        %1277 = vmatpush1.bf16.xpose.msra.mxu0 0
        %1278 = vmatprep.subr.bf16.mxu0 0
        %1279 = vmatpush1.bf16.xpose.msra.mxu0 0
        %1280 = vmatprep.subr.bf16.mxu0 0
        %1281 = vmatpush1.bf16.xpose.msra.mxu0 0
        %1282 = vmatprep.subr.bf16.mxu0 0
        %1283 = vmatpush1.bf16.xpose.msra.mxu0 0
        %1284 = vmatprep.subr.bf16.mxu0 0
        %1285 = vmatpush1.bf16.xpose.msra.mxu0 0
        %1286 = vmatprep.subr.bf16.mxu0 0
        %1287 = vmatpush1.bf16.xpose.msra.mxu0 0
        %1288 = vmatprep.subr.bf16.mxu0 0
        %1289 = vmatpush1.bf16.xpose.msra.mxu0 0
        %1290 = vmatprep.subr.bf16.mxu0 0
        %1291 = vmatpush1.bf16.xpose.msra.mxu0 0
        %1292 = vmatprep.subr.bf16.mxu0 0
        %1293 = vmatpush1.bf16.xpose.msra.mxu0 0
        %1294 = vmatprep.mubr.bf16.mxu0 0
        %1295 = vmatmul.mubr.bf16.gmra.mrb[0].mxu0 %v1260
        %v1296 = vpop.f32.mrb[0].mxu0
        %v1297 = vadd.f32 0.0, %v1296
        %v1298 = vpop.f32.mrb[0].mxu0
        %v1299 = vpop.f32.mrb[0].mxu0
        %v1300 = vpop.f32.mrb[0].mxu0
        %1301 = vdwg.mxu0
        %v1303 = vsel %vm530, %v1258, 0
        %1305 = vmatprep.subr.bf16.mxu0 0
        %1306 = vmatpush1.bf16.xpose.msra.mxu0 %v646
        %1307 = vmatprep.subr.bf16.mxu0 0
        %1308 = vmatpush1.bf16.xpose.msra.mxu0 0
        %1309 = vmatprep.subr.bf16.mxu0 0
        %1310 = vmatpush1.bf16.xpose.msra.mxu0 0
        %1311 = vmatprep.subr.bf16.mxu0 0
        %1312 = vmatpush1.bf16.xpose.msra.mxu0 0
        %1313 = vmatprep.subr.bf16.mxu0 0
        %1314 = vmatpush1.bf16.xpose.msra.mxu0 0
        %1315 = vmatprep.subr.bf16.mxu0 0
        %1316 = vmatpush1.bf16.xpose.msra.mxu0 0
        %1317 = vmatprep.subr.bf16.mxu0 0
        %1318 = vmatpush1.bf16.xpose.msra.mxu0 0
        %1319 = vmatprep.subr.bf16.mxu0 0
        %1320 = vmatpush1.bf16.xpose.msra.mxu0 0
        %1321 = vmatprep.subr.bf16.mxu0 0
        %1322 = vmatpush1.bf16.xpose.msra.mxu0 0
        %1323 = vmatprep.subr.bf16.mxu0 0
        %1324 = vmatpush1.bf16.xpose.msra.mxu0 0
        %1325 = vmatprep.subr.bf16.mxu0 0
        %1326 = vmatpush1.bf16.xpose.msra.mxu0 0
        %1327 = vmatprep.subr.bf16.mxu0 0
        %1328 = vmatpush1.bf16.xpose.msra.mxu0 0
        %1329 = vmatprep.subr.bf16.mxu0 0
        %1330 = vmatpush1.bf16.xpose.msra.mxu0 0
        %1331 = vmatprep.subr.bf16.mxu0 0
        %1332 = vmatpush1.bf16.xpose.msra.mxu0 0
        %1333 = vmatprep.subr.bf16.mxu0 0
        %1334 = vmatpush1.bf16.xpose.msra.mxu0 0
        %1335 = vmatprep.subr.bf16.mxu0 0
        %1336 = vmatpush1.bf16.xpose.msra.mxu0 0
        %1337 = vmatprep.mubr.bf16.mxu0 0
        %1338 = vmatmul.mubr.bf16.gmra.mrb[0].mxu0 %v1303
        %v1339 = vpop.f32.mrb[0].mxu0
        %v1340 = vadd.f32 0.0, %v1339
        %v1341 = vpop.f32.mrb[0].mxu0
        %v1342 = vpop.f32.mrb[0].mxu0
        %v1343 = vpop.f32.mrb[0].mxu0
        %1344 = vdwg.mxu0
        %v1345 = vsel %vm688, %v1297, -inf
        %1346 = vmax.xlane.f32.xlu0 %v1345
        %v1347 = vpop.xlane.xlu0 %1346
        %v1348 = vsel %vm688, %v1340, -inf
        %1349 = vmax.xlane.f32.xlu0 %v1348
        %v1350 = vpop.xlane.xlu0 %1349
        %v1351 = vsub.f32 %v1297, %v1347
        %v1352 = vsub.f32 %v1340, %v1350
        %v1353 = vmul.f32 %v1351, 1.442695
        %v1354 = vpow.pop %v1353
        %v1355 = vmul.f32 %v1352, 1.442695
        %v1356 = vpow.pop %v1355
        %v1357 = vsel %vm688, %v1354, 0.0
        %1358 = vadd.xlane.f32.xlu0 %v1357
        %v1359 = vpop.xlane.xlu0 %1358
        %v1360 = vsel %vm688, %v1356, 0.0
        %1361 = vadd.xlane.f32.xlu0 %v1360
        %v1362 = vpop.xlane.xlu0 %1361
        %v1363 = vrcp.pop %v1359
        %v1364 = vrcp.pop %v1362
        %v1365 = vmul.f32 %v1354, %v1363
        %v1366 = vmul.f32 %v1356, %v1364
        %v1367 = vsel %vm1254, %v714, 0.0
        %v1368 = vsel %vm1254, %v716, 0.0
        %v1369 = vpack.c.bf16 %v1367, %v1367
        %v1370 = vpack.c.bf16 %v1368, %v1368
        %v1371 = vpack.c.bf16 %v1365, %v1365
        %v1372 = vpack.c.bf16 %v1366, %v1366
        %v1374 = vsel %vm688, %v1371, 0
        %v1377 = vsel %vm851, %v1369, 0
        %1379 = vmatprep.subr.bf16.mxu0 0
        %1380 = vmatpush1.bf16.msra.mxu0 %v1377
        %1381 = vmatprep.subr.bf16.mxu0 0
        %1382 = vmatpush1.bf16.msra.mxu0 0
        %1383 = vmatprep.subr.bf16.mxu0 0
        %1384 = vmatpush1.bf16.msra.mxu0 0
        %1385 = vmatprep.subr.bf16.mxu0 0
        %1386 = vmatpush1.bf16.msra.mxu0 0
        %1387 = vmatprep.subr.bf16.mxu0 0
        %1388 = vmatpush1.bf16.msra.mxu0 0
        %1389 = vmatprep.subr.bf16.mxu0 0
        %1390 = vmatpush1.bf16.msra.mxu0 0
        %1391 = vmatprep.subr.bf16.mxu0 0
        %1392 = vmatpush1.bf16.msra.mxu0 0
        %1393 = vmatprep.subr.bf16.mxu0 0
        %1394 = vmatpush1.bf16.msra.mxu0 0
        %1395 = vmatprep.subr.bf16.mxu0 0
        %1396 = vmatpush1.bf16.msra.mxu0 0
        %1397 = vmatprep.subr.bf16.mxu0 0
        %1398 = vmatpush1.bf16.msra.mxu0 0
        %1399 = vmatprep.subr.bf16.mxu0 0
        %1400 = vmatpush1.bf16.msra.mxu0 0
        %1401 = vmatprep.subr.bf16.mxu0 0
        %1402 = vmatpush1.bf16.msra.mxu0 0
        %1403 = vmatprep.subr.bf16.mxu0 0
        %1404 = vmatpush1.bf16.msra.mxu0 0
        %1405 = vmatprep.subr.bf16.mxu0 0
        %1406 = vmatpush1.bf16.msra.mxu0 0
        %1407 = vmatprep.subr.bf16.mxu0 0
        %1408 = vmatpush1.bf16.msra.mxu0 0
        %1409 = vmatprep.subr.bf16.mxu0 0
        %1410 = vmatpush1.bf16.msra.mxu0 0
        %1411 = vmatprep.mubr.bf16.mxu0 0
        %1412 = vmatmul.mubr.bf16.gmra.mrb[0].mxu0 %v1374
        %v1413 = vpop.f32.mrb[0].mxu0
        %v1414 = vadd.f32 0.0, %v1413
        %v1415 = vpop.f32.mrb[0].mxu0
        %v1416 = vpop.f32.mrb[0].mxu0
        %v1417 = vpop.f32.mrb[0].mxu0
        %1418 = vdwg.mxu0
        %v1420 = vsel %vm688, %v1372, 0
        %v1423 = vsel %vm851, %v1370, 0
        %1425 = vmatprep.subr.bf16.mxu0 0
        %1426 = vmatpush1.bf16.msra.mxu0 %v1423
        %1427 = vmatprep.subr.bf16.mxu0 0
        %1428 = vmatpush1.bf16.msra.mxu0 0
        %1429 = vmatprep.subr.bf16.mxu0 0
        %1430 = vmatpush1.bf16.msra.mxu0 0
        %1431 = vmatprep.subr.bf16.mxu0 0
        %1432 = vmatpush1.bf16.msra.mxu0 0
        %1433 = vmatprep.subr.bf16.mxu0 0
        %1434 = vmatpush1.bf16.msra.mxu0 0
        %1435 = vmatprep.subr.bf16.mxu0 0
        %1436 = vmatpush1.bf16.msra.mxu0 0
        %1437 = vmatprep.subr.bf16.mxu0 0
        %1438 = vmatpush1.bf16.msra.mxu0 0
        %1439 = vmatprep.subr.bf16.mxu0 0
        %1440 = vmatpush1.bf16.msra.mxu0 0
        %1441 = vmatprep.subr.bf16.mxu0 0
        %1442 = vmatpush1.bf16.msra.mxu0 0
        %1443 = vmatprep.subr.bf16.mxu0 0
        %1444 = vmatpush1.bf16.msra.mxu0 0
        %1445 = vmatprep.subr.bf16.mxu0 0
        %1446 = vmatpush1.bf16.msra.mxu0 0
        %1447 = vmatprep.subr.bf16.mxu0 0
        %1448 = vmatpush1.bf16.msra.mxu0 0
        %1449 = vmatprep.subr.bf16.mxu0 0
        %1450 = vmatpush1.bf16.msra.mxu0 0
        %1451 = vmatprep.subr.bf16.mxu0 0
        %1452 = vmatpush1.bf16.msra.mxu0 0
        %1453 = vmatprep.subr.bf16.mxu0 0
        %1454 = vmatpush1.bf16.msra.mxu0 0
        %1455 = vmatprep.subr.bf16.mxu0 0
        %1456 = vmatpush1.bf16.msra.mxu0 0
        %1457 = vmatprep.mubr.bf16.mxu0 0
        %1458 = vmatmul.mubr.bf16.gmra.mrb[0].mxu0 %v1420
        %v1459 = vpop.f32.mrb[0].mxu0
        %v1460 = vadd.f32 0.0, %v1459
        %v1461 = vpop.f32.mrb[0].mxu0
        %v1462 = vpop.f32.mrb[0].mxu0
        %v1463 = vpop.f32.mrb[0].mxu0
        %1464 = vdwg.mxu0
        %v1465 = vadd.f32 %v1248, %v1414
        %v1466 = vadd.f32 %v1249, %v1460
        %v1467 = vpack.c.bf16 %v1466, %v1465
        %v1468 = vld [vmem:[%s470] sm:$0xf]
        %v1469 = vld [vmem:[%s470 + $0x4] sm:$0xf]
        %v1470 = vld [vmem:[%s470 + $0x8] sm:$0xf]
        %v1471 = vld [vmem:[%s470 + $0xc] sm:$0xf]
        %v1472 = vld [vmem:[%s473] sm:$0x1]
        %v1474 = vlaneseq
        %v1475 = vshrl.u32 %v1474, 7
        %v1476 = vsub.s32 0, %v1475
        %v1477 = vrot.slane %v1472, %v1476
        %v1483 = vunpack.c.l.b16 %v1468
        %v1484 = vunpack.c.l.b16 %v1469
        %v1485 = vunpack.c.l.b16 %v1470
        %v1486 = vunpack.c.l.b16 %v1471
        %v1487 = vpack.c.b16 %v1484, %v1483
        %v1488 = vpack.c.b16 %v1486, %v1485
        %v1492 = vsel %vm530, %v1467, 0
        %1494 = vmatprep.subr.bf16.mxu0 0
        %1495 = vmatpush1.bf16.msra.mxu0 %v1487
        %1496 = vmatprep.subr.bf16.mxu0 0
        %1497 = vmatpush1.bf16.msra.mxu0 %v1488
        %1498 = vmatprep.subr.bf16.mxu0 0
        %1499 = vmatpush1.bf16.msra.mxu0 0
        %1500 = vmatprep.subr.bf16.mxu0 0
        %1501 = vmatpush1.bf16.msra.mxu0 0
        %1502 = vmatprep.subr.bf16.mxu0 0
        %1503 = vmatpush1.bf16.msra.mxu0 0
        %1504 = vmatprep.subr.bf16.mxu0 0
        %1505 = vmatpush1.bf16.msra.mxu0 0
        %1506 = vmatprep.subr.bf16.mxu0 0
        %1507 = vmatpush1.bf16.msra.mxu0 0
        %1508 = vmatprep.subr.bf16.mxu0 0
        %1509 = vmatpush1.bf16.msra.mxu0 0
        %1510 = vmatprep.subr.bf16.mxu0 0
        %1511 = vmatpush1.bf16.msra.mxu0 0
        %1512 = vmatprep.subr.bf16.mxu0 0
        %1513 = vmatpush1.bf16.msra.mxu0 0
        %1514 = vmatprep.subr.bf16.mxu0 0
        %1515 = vmatpush1.bf16.msra.mxu0 0
        %1516 = vmatprep.subr.bf16.mxu0 0
        %1517 = vmatpush1.bf16.msra.mxu0 0
        %1518 = vmatprep.subr.bf16.mxu0 0
        %1519 = vmatpush1.bf16.msra.mxu0 0
        %1520 = vmatprep.subr.bf16.mxu0 0
        %1521 = vmatpush1.bf16.msra.mxu0 0
        %1522 = vmatprep.subr.bf16.mxu0 0
        %1523 = vmatpush1.bf16.msra.mxu0 0
        %1524 = vmatprep.subr.bf16.mxu0 0
        %1525 = vmatpush1.bf16.msra.mxu0 0
        %1526 = vmatprep.mubr.bf16.mxu0 0
        %1527 = vmatmul.mubr.bf16.gmra.mrb[0].mxu0 %v1492
        %v1528 = vpop.f32.mrb[0].mxu0
        %v1529 = vadd.f32 %v1477, %v1528
        %v1530 = vpop.f32.mrb[0].mxu0
        %v1531 = vpop.f32.mrb[0].mxu0
        %v1532 = vadd.f32 %v1477, %v1531
        %v1533 = vpop.f32.mrb[0].mxu0
        %1534 = vdwg.mxu0
        %v1535 = vld [vmem:[%s477] sm:$0xf]
        %v1536 = vadd.f32 %v504, %v1529
        %v1537 = vadd.f32 %v505, %v1532
        %v1538 = vsel %vm530, %v1536, 0.0
        %1539 = vadd.xlane.f32.xlu0 %v1538
        %v1540 = vpop.xlane.xlu0 %1539
        %v1541 = vsel %vm530, %v1537, 0.0
        %1542 = vadd.xlane.f32.xlu0 %v1541
        %v1543 = vpop.xlane.xlu0 %1542
        %v1544 = vrcp.pop 32.0
        %v1545 = vmul.f32 %v1540, %v1544
        %v1546 = vmul.f32 %v1543, %v1544
        %v1547 = vsub.f32 %v1536, %v1545
        %v1548 = vsub.f32 %v1537, %v1546
        %v1549 = vmul.f32 %v1547, %v1547
        %v1550 = vmul.f32 %v1548, %v1548
        %v1551 = vsel %vm530, %v1549, 0.0
        %1552 = vadd.xlane.f32.xlu0 %v1551
        %v1553 = vpop.xlane.xlu0 %1552
        %v1554 = vsel %vm530, %v1550, 0.0
        %1555 = vadd.xlane.f32.xlu0 %v1554
        %v1556 = vpop.xlane.xlu0 %1555
        %v1557 = vmul.f32 %v1553, %v1544
        %v1558 = vmul.f32 %v1556, %v1544
        %v1559 = vadd.f32 %v1557, 1e-05
        %v1560 = vadd.f32 %v1558, 1e-05
        %v1561 = vrsqrt.pop %v1559
        %v1562 = vrsqrt.pop %v1560
        %v1563 = vmul.f32 %v1547, %v1561
        %v1564 = vmul.f32 %v1548, %v1562
        %v1565 = vlaneseq
        %v1566 = vshrl.u32 %v1565, 7
        %v1567 = vsub.s32 0, %v1566
        %v1568 = vrot.slane %v1535, %v1567
        %v1569 = vmul.f32 %v1563, %v1568
        %v1570 = vmul.f32 %v1564, %v1568
        %v1571 = vlaneseq
        %v1572 = vshrl.u32 %v1571, 7
        %v1573 = vsub.s32 1, %v1572
        %v1574 = vrot.slane %v1535, %v1573
        %v1575 = vadd.f32 %v1569, %v1574
        %v1576 = vadd.f32 %v1570, %v1574
        %v1577 = vpack.c.bf16 %v1576, %v1575
        %v1578 = vld [vmem:[%s482] sm:$0xf]
        %v1579 = vld [vmem:[%s482 + $0x4] sm:$0xf]
        %v1580 = vld [vmem:[%s482 + $0x8] sm:$0xf]
        %v1581 = vld [vmem:[%s482 + $0xc] sm:$0xf]
        %v1582 = vld [vmem:[%s485] sm:$0x1]
        %v1584 = vlaneseq
        %v1585 = vshrl.u32 %v1584, 7
        %v1586 = vsub.s32 0, %v1585
        %v1587 = vrot.slane %v1582, %v1586
        %v1593 = vunpack.c.l.b16 %v1578
        %v1594 = vunpack.c.l.b16 %v1579
        %v1595 = vunpack.c.l.b16 %v1580
        %v1596 = vunpack.c.l.b16 %v1581
        %v1597 = vpack.c.b16 %v1594, %v1593
        %v1598 = vpack.c.b16 %v1596, %v1595
        %v1602 = vsel %vm530, %v1577, 0
        %1604 = vmatprep.subr.bf16.mxu0 0
        %1605 = vmatpush1.bf16.msra.mxu0 %v1597
        %1606 = vmatprep.subr.bf16.mxu0 0
        %1607 = vmatpush1.bf16.msra.mxu0 %v1598
        %1608 = vmatprep.subr.bf16.mxu0 0
        %1609 = vmatpush1.bf16.msra.mxu0 0
        %1610 = vmatprep.subr.bf16.mxu0 0
        %1611 = vmatpush1.bf16.msra.mxu0 0
        %1612 = vmatprep.subr.bf16.mxu0 0
        %1613 = vmatpush1.bf16.msra.mxu0 0
        %1614 = vmatprep.subr.bf16.mxu0 0
        %1615 = vmatpush1.bf16.msra.mxu0 0
        %1616 = vmatprep.subr.bf16.mxu0 0
        %1617 = vmatpush1.bf16.msra.mxu0 0
        %1618 = vmatprep.subr.bf16.mxu0 0
        %1619 = vmatpush1.bf16.msra.mxu0 0
        %1620 = vmatprep.subr.bf16.mxu0 0
        %1621 = vmatpush1.bf16.msra.mxu0 0
        %1622 = vmatprep.subr.bf16.mxu0 0
        %1623 = vmatpush1.bf16.msra.mxu0 0
        %1624 = vmatprep.subr.bf16.mxu0 0
        %1625 = vmatpush1.bf16.msra.mxu0 0
        %1626 = vmatprep.subr.bf16.mxu0 0
        %1627 = vmatpush1.bf16.msra.mxu0 0
        %1628 = vmatprep.subr.bf16.mxu0 0
        %1629 = vmatpush1.bf16.msra.mxu0 0
        %1630 = vmatprep.subr.bf16.mxu0 0
        %1631 = vmatpush1.bf16.msra.mxu0 0
        %1632 = vmatprep.subr.bf16.mxu0 0
        %1633 = vmatpush1.bf16.msra.mxu0 0
        %1634 = vmatprep.subr.bf16.mxu0 0
        %1635 = vmatpush1.bf16.msra.mxu0 0
        %1636 = vmatprep.mubr.bf16.mxu0 0
        %1637 = vmatmul.mubr.bf16.gmra.mrb[0].mxu0 %v1602
        %v1638 = vpop.f32.mrb[0].mxu0
        %v1639 = vadd.f32 %v1587, %v1638
        %v1640 = vpop.f32.mrb[0].mxu0
        %v1641 = vpop.f32.mrb[0].mxu0
        %v1642 = vadd.f32 %v1587, %v1641
        %v1643 = vpop.f32.mrb[0].mxu0
        %1644 = vdwg.mxu0
        %v1645 = vmax.f32 %v1639, 0.0
        %v1646 = vmax.f32 %v1642, 0.0
        %v1647 = vpack.c.bf16 %v1646, %v1645
        %v1648 = vld [vmem:[%s490] sm:$0xf]
        %v1649 = vld [vmem:[%s490 + $0x4] sm:$0xf]
        %v1650 = vld [vmem:[%s490 + $0x8] sm:$0xf]
        %v1651 = vld [vmem:[%s490 + $0xc] sm:$0xf]
        %v1652 = vld [vmem:[%s490 + $0x10] sm:$0xf]
        %v1653 = vld [vmem:[%s490 + $0x14] sm:$0xf]
        %v1654 = vld [vmem:[%s490 + $0x18] sm:$0xf]
        %v1655 = vld [vmem:[%s490 + $0x1c] sm:$0xf]
        %v1656 = vld [vmem:[%s493] sm:$0x1]
        %v1658 = vlaneseq
        %v1659 = vshrl.u32 %v1658, 7
        %v1660 = vsub.s32 0, %v1659
        %v1661 = vrot.slane %v1656, %v1660
        %v1671 = vunpack.c.l.b16 %v1648
        %v1672 = vunpack.c.l.b16 %v1649
        %v1673 = vunpack.c.l.b16 %v1650
        %v1674 = vunpack.c.l.b16 %v1651
        %v1675 = vunpack.c.l.b16 %v1652
        %v1676 = vunpack.c.l.b16 %v1653
        %v1677 = vunpack.c.l.b16 %v1654
        %v1678 = vunpack.c.l.b16 %v1655
        %v1679 = vpack.c.b16 %v1672, %v1671
        %v1680 = vpack.c.b16 %v1674, %v1673
        %v1681 = vpack.c.b16 %v1676, %v1675
        %v1682 = vpack.c.b16 %v1678, %v1677
        %vm1687 = vcmask 523264
        %v1689 = vsel %vm1687, %v1647, 0
        %1691 = vmatprep.subr.bf16.mxu0 0
        %1692 = vmatpush1.bf16.msra.mxu0 %v1679
        %1693 = vmatprep.subr.bf16.mxu0 0
        %1694 = vmatpush1.bf16.msra.mxu0 %v1680
        %1695 = vmatprep.subr.bf16.mxu0 0
        %1696 = vmatpush1.bf16.msra.mxu0 %v1681
        %1697 = vmatprep.subr.bf16.mxu0 0
        %1698 = vmatpush1.bf16.msra.mxu0 %v1682
        %1699 = vmatprep.subr.bf16.mxu0 0
        %1700 = vmatpush1.bf16.msra.mxu0 0
        %1701 = vmatprep.subr.bf16.mxu0 0
        %1702 = vmatpush1.bf16.msra.mxu0 0
        %1703 = vmatprep.subr.bf16.mxu0 0
        %1704 = vmatpush1.bf16.msra.mxu0 0
        %1705 = vmatprep.subr.bf16.mxu0 0
        %1706 = vmatpush1.bf16.msra.mxu0 0
        %1707 = vmatprep.subr.bf16.mxu0 0
        %1708 = vmatpush1.bf16.msra.mxu0 0
        %1709 = vmatprep.subr.bf16.mxu0 0
        %1710 = vmatpush1.bf16.msra.mxu0 0
        %1711 = vmatprep.subr.bf16.mxu0 0
        %1712 = vmatpush1.bf16.msra.mxu0 0
        %1713 = vmatprep.subr.bf16.mxu0 0
        %1714 = vmatpush1.bf16.msra.mxu0 0
        %1715 = vmatprep.subr.bf16.mxu0 0
        %1716 = vmatpush1.bf16.msra.mxu0 0
        %1717 = vmatprep.subr.bf16.mxu0 0
        %1718 = vmatpush1.bf16.msra.mxu0 0
        %1719 = vmatprep.subr.bf16.mxu0 0
        %1720 = vmatpush1.bf16.msra.mxu0 0
        %1721 = vmatprep.subr.bf16.mxu0 0
        %1722 = vmatpush1.bf16.msra.mxu0 0
        %1723 = vmatprep.mubr.bf16.mxu0 0
        %1724 = vmatmul.mubr.bf16.gmra.mrb[0].mxu0 %v1689
        %v1725 = vpop.f32.mrb[0].mxu0
        %v1726 = vadd.f32 %v1661, %v1725
        %v1727 = vpop.f32.mrb[0].mxu0
        %v1728 = vpop.f32.mrb[0].mxu0
        %v1729 = vadd.f32 %v1661, %v1728
        %v1730 = vpop.f32.mrb[0].mxu0
        %1731 = vdwg.mxu0
        %v1732 = vadd.f32 %v1575, %v1726
        %v1733 = vadd.f32 %v1576, %v1729
        %v1734 = vsel %vm530, %v1732, 0.0
        %1735 = vadd.xlane.f32.xlu0 %v1734
        %v1736 = vpop.xlane.xlu0 %1735
        %v1737 = vsel %vm530, %v1733, 0.0
        %1738 = vadd.xlane.f32.xlu0 %v1737
        %v1739 = vpop.xlane.xlu0 %1738
        %v1740 = vmul.f32 %v1736, %v1544
        %v1741 = vmul.f32 %v1739, %v1544
        %v1742 = vsub.f32 %v1732, %v1740
        %v1743 = vsub.f32 %v1733, %v1741
        %v1744 = vmul.f32 %v1742, %v1742
        %v1745 = vmul.f32 %v1743, %v1743
        %v1746 = vsel %vm530, %v1744, 0.0
        %1747 = vadd.xlane.f32.xlu0 %v1746
        %v1748 = vpop.xlane.xlu0 %1747
        %v1749 = vsel %vm530, %v1745, 0.0
        %1750 = vadd.xlane.f32.xlu0 %v1749
        %v1751 = vpop.xlane.xlu0 %1750
        %v1752 = vmul.f32 %v1748, %v1544
        %v1753 = vmul.f32 %v1751, %v1544
        %v1754 = vadd.f32 %v1752, 1e-05
        %v1755 = vadd.f32 %v1753, 1e-05
        %v1756 = vrsqrt.pop %v1754
        %v1757 = vrsqrt.pop %v1755
        %v1758 = vmul.f32 %v1742, %v1756
        %v1759 = vmul.f32 %v1743, %v1757
        %v1760 = vlaneseq
        %v1761 = vshrl.u32 %v1760, 7
        %v1762 = vsub.s32 2, %v1761
        %v1763 = vrot.slane %v1535, %v1762
        %v1764 = vmul.f32 %v1758, %v1763
        %v1765 = vmul.f32 %v1759, %v1763
        %v1766 = vlaneseq
        %v1767 = vshrl.u32 %v1766, 7
        %v1768 = vsub.s32 3, %v1767
        %v1769 = vrot.slane %v1535, %v1768
        %v1770 = vadd.f32 %v1764, %v1769
        %v1771 = vadd.f32 %v1765, %v1769
        %1772 = vst.msk [vmem:[#allocation2] sm:$0xff] %vm530, %v1770
        %1773 = vst.msk [vmem:[#allocation2 + $0x8] sm:$0xff] %vm530, %v1771
        %p1774 = scmp.eq.s32.totalorder %s23, 1
        // Predicated region
        $region69: #{tpu_custom_call.1} parent=59 // pred_check
          %p1775 = pneg %p1774
        $region70: #{tpu_custom_call.1} parent=59 // pred_check_branch
          %1777 = sbr.rel (%p1775) target = $region72
        $region71: #{tpu_custom_call.1} parent=59 // pred_region
          %1778 = vst.msk [vmem:[#allocation6] sm:$0xff] %vm530, %v1770
          %1779 = vst.msk [vmem:[#allocation6 + $0x8] sm:$0xff] %vm530, %v1771
        $region72: #{tpu_custom_call.1} parent=59 // pred_fallthru
          _
        // Predicated region
        $region73: #{tpu_custom_call.1} parent=59 // pred_check
          %p1780 = pneg %p291
        $region74: #{tpu_custom_call.1} parent=59 // pred_check_branch
          %1782 = sbr.rel (%p1780) target = $region76
        $region75: #{tpu_custom_call.1} parent=59 // pred_region
          %s1784 = ssub.s32 256, 256
          %1785 = vsyncadd [#allocation5], %s1784
          %s1786 = sshll.u32 [#allocation6], 4
          %s1787 = int_to_ptr.vmem [resolvable:$true] %s1786
          %1792 = dma.vmem_to_hbm [thread:$0]  %s1787, 256, %s10, [#allocation5], 128, 128, 8
        $region76: #{tpu_custom_call.1} parent=59 // pred_fallthru
          _
        // Predicated region
        $region77: #{tpu_custom_call.1} parent=59 // pred_check
          %p1793 = pneg %p291
        $region78: #{tpu_custom_call.1} parent=59 // pred_check_branch
          %1795 = sbr.rel (%p1793) target = $region80
        $region79: #{tpu_custom_call.1} parent=59 // pred_region
          %1796 = dma.done [#allocation5], 256
        $region80: #{tpu_custom_call.1} parent=59 // pred_fallthru
          _
      $region60: #{tpu_custom_call.1} parent=5 // pred_fallthru
        _
      %p1797 = scmp.le.s32.totalorder 2, %s18
      // Predicated region
      $region81: #{tpu_custom_call.1} parent=5 // pred_check
        %p1798 = pneg %p1797
      $region82: #{tpu_custom_call.1} parent=5 // pred_check_branch
        %1800 = sbr.rel (%p1798) target = $region84
      $region83: #{tpu_custom_call.1} parent=5 // pred_region
        %s1801 = ssub.s32 %s18, 2
      $region84: #{tpu_custom_call.1} parent=5 // pred_fallthru
        _
    $region6: #{tpu_custom_call.1} parent=1 // loop_footer
      %s22 = sadd.s32 1, %s18
    $region7: #{tpu_custom_call.1} parent=1 // loop_footer_branch
      %17 = sbr.rel target = $region3
    $region8: #{tpu_custom_call.1} parent=1 // loop_exit
      _
    %1802 = vsyncpa [#allocation4], 1
    %s1803 = scalar_lea.sflag [#allocation4], 1
    %1804 = vsyncpa %s1803, 1
    %1805 = vsyncpa [#allocation5], 1
    %s1806 = scalar_lea.sflag [#allocation5], 1
    %1807 = vsyncpa %s1806, 1

</llo_original>
